<compile_context>
chip_gen: v7x
topology: tpu7x:2x2x1
jax: 0.10.0
libtpu: 0.0.40
codegen_flags: <defaults>
</compile_context>

<pallas_src>
import functools

import jax
import jax.numpy as jnp
import numpy as np
from jax import lax
from jax.experimental import pallas as pl
from jax.experimental.pallas import tpu as pltpu


def _egnca_rollout_kernel(coord0_ref, h0_ref, adj_ref,
                          w1i_ref, w1j_ref, w1r_ref, b1_ref,
                          w2_ref, b2_ref, w3_ref, b3_ref, w4_ref,
                          w5h_ref, w5m_ref, b5_ref, w6_ref, b6_ref,
                          out_ref, *, n_steps):
    n, c = coord0_ref.shape
    d = h0_ref.shape[1]
    m_dim = w2_ref.shape[0]

    # ---- step-invariants: loaded / computed ONCE, reused across the whole rollout ----
    adj = adj_ref[...]                                                       # (n, n)
    inv_deg = 1.0 / jnp.maximum(jnp.sum(adj, axis=1, keepdims=True), 1.0)    # (n, 1)
    adj_b = jnp.broadcast_to(adj[:, :, None], (n, n, m_dim))                 # msg mask
    w1i = w1i_ref[...]
    w1j = w1j_ref[...]
    w1r_b = w1r_ref[...][None]                                               # (1, 1, m)
    b1_b = b1_ref[...][None]                                                 # (1, 1, m)
    w2 = w2_ref[...]
    b2 = b2_ref[...]
    w3 = w3_ref[...]
    b3 = b3_ref[...]
    w4 = w4_ref[...]
    w5h = w5h_ref[...]
    w5m = w5m_ref[...]
    b5 = b5_ref[...]
    w6 = w6_ref[...]
    b6 = b6_ref[...]

    def step(_, carry):
        coord, h = carry                                                     # (n,c),(n,d)

        # -- radial via the Gram trick (MXU), no (n,n,c) diff tensor --
        sq = jnp.sum(coord * coord, axis=-1, keepdims=True)                  # (n, 1)
        gram = lax.dot_general(coord, coord, (((1,), (1,)), ((), ())),
                               preferred_element_type=jnp.float32)           # (n, n)
        radial = jnp.maximum(sq + jnp.transpose(sq) - 2.0 * gram, 0.0)       # (n, n)
        inv_d1 = 1.0 / (jnp.sqrt(radial) + 1.0)                              # normalize

        # -- message MLP: two small dots (no non-128 lane slicing), pair tensor --
        hwi = jnp.dot(h, w1i, preferred_element_type=jnp.float32)            # receiver i
        hwj = jnp.dot(h, w1j, preferred_element_type=jnp.float32)            # sender j
        m1 = jnp.tanh(hwi[:, None, :] + hwj[None, :, :]
                      + radial[:, :, None] * w1r_b + b1_b)                   # (n, n, m)
        msg = jnp.tanh(jnp.dot(m1.reshape(n * n, m_dim), w2,
                               preferred_element_type=jnp.float32) + b2)     # (n*n, m)

        # -- coord MLP -> per-pair scalar weight (has_coord_act=True) --
        t = jnp.tanh(jnp.dot(msg, w3, preferred_element_type=jnp.float32) + b3)
        cw = jnp.tanh(jnp.dot(t, w4, preferred_element_type=jnp.float32))    # (n*n, 1)

        # -- coord update: 2-D pair weight, sum_j W_ij (c_i - c_j)
        #    = rowsum(W) c_i - W @ c  (no lane-sparse 3-D intermediates) --
        w2d = adj * inv_d1 * cw.reshape(n, n)                                # (n, n)
        row_w = jnp.sum(w2d, axis=1, keepdims=True)                          # (n, 1)
        wc = jnp.dot(w2d, coord, preferred_element_type=jnp.float32)         # (n, c)
        new_coord = coord + (row_w * coord - wc) * inv_deg                   # mean aggr

        # -- node update: sum-aggregated messages, two dots (no lane concat), residual --
        m_agg = jnp.sum(msg.reshape(n, n, m_dim) * adj_b, axis=1)            # (n, m)
        u = jnp.tanh(jnp.dot(h, w5h, preferred_element_type=jnp.float32)
                     + jnp.dot(m_agg, w5m, preferred_element_type=jnp.float32)
                     + b5)
        new_h = h + jnp.dot(u, w6, preferred_element_type=jnp.float32) + b6

        # -- NodeNorm ('nn', root_power=2): x / std**0.5, std over feature axis --
        mean = jnp.mean(new_h, axis=-1, keepdims=True)
        var = jnp.mean((new_h - mean) ** 2, axis=-1, keepdims=True)
        new_h = new_h / jnp.sqrt(jnp.sqrt(var + 1e-5))

        return new_coord, new_h

    coord, h = lax.fori_loop(0, n_steps, step, (coord0_ref[...], h0_ref[...]))

    # ---- lane-dense packed writeback (coord || h || 0-pad), single unmasked store ----
    pad = jnp.zeros((n, out_ref.shape[1] - c - d), jnp.float32)
    out_ref[...] = jnp.concatenate([coord, h, pad], axis=-1)


def encoder_egnca_forward(coord0, h0, adj, params, n_steps):
    """The whole n_steps EGC + NodeNorm rollout fused into one pallas_call."""
    n, c = coord0.shape
    d = h0.shape[1]
    m = params['w2'].shape[0]
    p_lanes = 128                                   # lane-dense packed output width

    inputs = (coord0, h0, adj,
              params['w1i'], params['w1j'], params['w1r'], params['b1'],
              params['w2'], params['b2'], params['w3'], params['b3'], params['w4'],
              params['w5h'], params['w5m'], params['b5'], params['w6'], params['b6'])

    # advisory cost estimate for the whole rollout
    flops = n_steps * (2 * n * n * c                      # gram
                       + 4 * n * d * m                    # h @ w1i, h @ w1j
                       + 4 * n * n * m * m                # pair MLP (w2, w3)
                       + 2 * n * n * m                    # pair scalar (w4)
                       + 2 * n * n * c                    # w2d @ coord
                       + 2 * n * n * m                    # masked message aggregation
                       + 2 * n * (d + m) * m + 2 * n * m * d)   # node MLP
    transcendentals = n_steps * (3 * n * n * m + 2 * n * n + n * m + 2 * n)
    bytes_accessed = 4 * (n * p_lanes + sum(int(np.prod(x.shape)) for x in inputs))

    packed = pl.pallas_call(
        functools.partial(_egnca_rollout_kernel, n_steps=n_steps),
        out_shape=jax.ShapeDtypeStruct((n, p_lanes), jnp.float32),
        compiler_params=pltpu.CompilerParams(vmem_limit_bytes=32 * 1024 * 1024),
        cost_estimate=pl.CostEstimate(flops=flops,
                                      transcendentals=transcendentals,
                                      bytes_accessed=bytes_accessed),
    )(*inputs)

    return packed[:, :c], packed[:, c:c + d]


def egc_step_ref(coord, h, edge_index, p):
    """Pure-JAX reference using the sparse edge list (mirrors the PyTorch graph conv)."""
    s, t = edge_index[0], edge_index[1]
    N = coord.shape[0]
    diff = coord[t] - coord[s]
    radial = jnp.sum(diff ** 2, axis=-1, keepdims=True)
    diff_n = diff / (jnp.sqrt(radial) + 1.0)
    W1 = jnp.concatenate([p['w1i'], p['w1j'], p['w1r']], axis=0)
    feat = jnp.concatenate([h[t], h[s], radial], axis=-1)
    m = jnp.tanh(feat @ W1 + p['b1'])
    m = jnp.tanh(m @ p['w2'] + p['b2'])
    cw = jnp.tanh(jnp.tanh(m @ p['w3'] + p['b3']) @ p['w4'])
    trans = diff_n * cw
    coord_sum = jax.ops.segment_sum(trans, t, num_segments=N)
    deg = jax.ops.segment_sum(jnp.ones((t.shape[0], 1), jnp.float32), t, num_segments=N)
    out_coord = coord + coord_sum / jnp.maximum(deg, 1.0)
    m_agg = jax.ops.segment_sum(m, t, num_segments=N)
    W5 = jnp.concatenate([p['w5h'], p['w5m']], axis=0)
    u = jnp.tanh(jnp.concatenate([h, m_agg], axis=-1) @ W5 + p['b5'])
    out_h = h + (u @ p['w6'] + p['b6'])
    var = jnp.mean((out_h - jnp.mean(out_h, axis=-1, keepdims=True)) ** 2,
                   axis=-1, keepdims=True)
    std = jnp.sqrt(var + 1e-5)
    return out_coord, out_h / jnp.sqrt(std)


def init_params(key, node_dim, message_dim):
    D, M = node_dim, message_dim
    ks = jax.random.split(key, 14)
    w = lambda k, shape, s: jax.random.normal(k, shape, jnp.float32) * s
    return {
        'w1i': w(ks[0], (D, M), 0.3), 'w1j': w(ks[1], (D, M), 0.3),
        'w1r': w(ks[2], (1, M), 0.3), 'b1': w(ks[3], (1, M), 0.1),
        'w2': w(ks[4], (M, M), 0.3), 'b2': w(ks[5], (1, M), 0.1),
        'w3': w(ks[6], (M, M), 0.3), 'b3': w(ks[7], (1, M), 0.1),
        'w4': w(ks[8], (M, 1), 0.1),
        'w5h': w(ks[9], (D, M), 0.3), 'w5m': w(ks[10], (M, M), 0.3),
        'b5': w(ks[11], (1, M), 0.1),
        'w6': w(ks[12], (M, D), 0.3), 'b6': w(ks[13], (1, D), 0.1),
    }


if __name__ == "__main__":
    N, COORD_DIM, NODE_DIM, MSG_DIM = 16, 3, 8, 16
    N_STEPS = 3

    key = jax.random.PRNGKey(0)
    k_adj, k_coord, k_param = jax.random.split(key, 3)

    # random directed graph (no self-loops); adj[i, j] = 1 iff edge j -> i
    adj = (jax.random.uniform(k_adj, (N, N)) < 0.3).astype(jnp.float32)
    adj = adj * (1.0 - jnp.eye(N, dtype=jnp.float32))
    adj_np = np.array(adj)
    recv, send = np.nonzero(adj_np)
    edge_index = jnp.array(np.stack([send, recv]).astype(np.int32))   # (2, E)

    coord0 = jax.random.normal(k_coord, (N, COORD_DIM), jnp.float32)  # init_coord ~ normal
    h0 = jnp.ones((N, NODE_DIM), jnp.float32)                         # init_node_feat = ones
    params = init_params(k_param, NODE_DIM, MSG_DIM)

    # Pallas path: the whole rollout in one kernel call
    coord_k, h_k = encoder_egnca_forward(coord0, h0, adj, params, N_STEPS)
    jax.block_until_ready((coord_k, h_k))

    # Reference path
    coord_r, h_r = coord0, h0
    for _ in range(N_STEPS):
        coord_r, h_r = egc_step_ref(coord_r, h_r, edge_index, params)
    jax.block_until_ready((coord_r, h_r))

    np.testing.assert_allclose(np.array(coord_k), np.array(coord_r), rtol=3e-3, atol=3e-3)
    np.testing.assert_allclose(np.array(h_k), np.array(h_r), rtol=3e-3, atol=3e-3)
    print("KERNEL_OK")
</pallas_src>

<mosaic_0001>
module attributes {stable_mosaic.version = 11 : i64} {
  func.func @_egnca_rollout_kernel(%arg0: memref<16x3xf32, #tpu.memory_space<vmem>>, %arg1: memref<16x8xf32, #tpu.memory_space<vmem>>, %arg2: memref<16x16xf32, #tpu.memory_space<vmem>>, %arg3: memref<8x16xf32, #tpu.memory_space<vmem>>, %arg4: memref<8x16xf32, #tpu.memory_space<vmem>>, %arg5: memref<1x16xf32, #tpu.memory_space<vmem>>, %arg6: memref<1x16xf32, #tpu.memory_space<vmem>>, %arg7: memref<16x16xf32, #tpu.memory_space<vmem>>, %arg8: memref<1x16xf32, #tpu.memory_space<vmem>>, %arg9: memref<16x16xf32, #tpu.memory_space<vmem>>, %arg10: memref<1x16xf32, #tpu.memory_space<vmem>>, %arg11: memref<16x1xf32, #tpu.memory_space<vmem>>, %arg12: memref<8x16xf32, #tpu.memory_space<vmem>>, %arg13: memref<16x16xf32, #tpu.memory_space<vmem>>, %arg14: memref<1x16xf32, #tpu.memory_space<vmem>>, %arg15: memref<16x8xf32, #tpu.memory_space<vmem>>, %arg16: memref<1x8xf32, #tpu.memory_space<vmem>>, %arg17: memref<16x128xf32, #tpu.memory_space<vmem>>) attributes {dimension_semantics = [], scalar_prefetch = 0 : i64, scratch_operands = 0 : i64, tpu.core_type = #tpu.core_type<tc>} {
    %c0 = arith.constant 0 : index
    %c0_0 = arith.constant 0 : index
    %0 = vector.load %arg2[%c0, %c0_0] : memref<16x16xf32, #tpu.memory_space<vmem>>, vector<16x16xf32>
    %cst = arith.constant dense<0.000000e+00> : vector<16xf32>
    %1 = vector.multi_reduction <add>, %0, %cst [1] : vector<16x16xf32> to vector<16xf32>
    %2 = vector.shape_cast %1 : vector<16xf32> to vector<16x1xf32>
    %cst_1 = arith.constant 1.000000e+00 : f32
    %3 = vector.broadcast %cst_1 : f32 to vector<16x1xf32>
    %4 = arith.maximumf %2, %3 : vector<16x1xf32>
    %cst_2 = arith.constant 1.000000e+00 : f32
    %5 = vector.broadcast %cst_2 : f32 to vector<16x1xf32>
    %6 = arith.divf %5, %4 : vector<16x1xf32>
    %7 = vector.shape_cast %0 : vector<16x16xf32> to vector<16x16x1xf32>
    %8 = vector.shape_cast %7 : vector<16x16x1xf32> to vector<16x16x1xf32>
    %9 = vector.broadcast %8 : vector<16x16x1xf32> to vector<16x16x16xf32>
    %c0_3 = arith.constant 0 : index
    %c0_4 = arith.constant 0 : index
    %10 = vector.load %arg3[%c0_3, %c0_4] : memref<8x16xf32, #tpu.memory_space<vmem>>, vector<8x16xf32>
    %c0_5 = arith.constant 0 : index
    %c0_6 = arith.constant 0 : index
    %11 = vector.load %arg4[%c0_5, %c0_6] : memref<8x16xf32, #tpu.memory_space<vmem>>, vector<8x16xf32>
    %c0_7 = arith.constant 0 : index
    %c0_8 = arith.constant 0 : index
    %12 = vector.load %arg5[%c0_7, %c0_8] : memref<1x16xf32, #tpu.memory_space<vmem>>, vector<1x16xf32>
    %13 = vector.shape_cast %12 : vector<1x16xf32> to vector<1x1x16xf32>
    %c0_9 = arith.constant 0 : index
    %c0_10 = arith.constant 0 : index
    %14 = vector.load %arg6[%c0_9, %c0_10] : memref<1x16xf32, #tpu.memory_space<vmem>>, vector<1x16xf32>
    %15 = vector.shape_cast %14 : vector<1x16xf32> to vector<1x1x16xf32>
    %c0_11 = arith.constant 0 : index
    %c0_12 = arith.constant 0 : index
    %16 = vector.load %arg7[%c0_11, %c0_12] : memref<16x16xf32, #tpu.memory_space<vmem>>, vector<16x16xf32>
    %c0_13 = arith.constant 0 : index
    %c0_14 = arith.constant 0 : index
    %17 = vector.load %arg8[%c0_13, %c0_14] : memref<1x16xf32, #tpu.memory_space<vmem>>, vector<1x16xf32>
    %c0_15 = arith.constant 0 : index
    %c0_16 = arith.constant 0 : index
    %18 = vector.load %arg9[%c0_15, %c0_16] : memref<16x16xf32, #tpu.memory_space<vmem>>, vector<16x16xf32>
    %c0_17 = arith.constant 0 : index
    %c0_18 = arith.constant 0 : index
    %19 = vector.load %arg10[%c0_17, %c0_18] : memref<1x16xf32, #tpu.memory_space<vmem>>, vector<1x16xf32>
    %c0_19 = arith.constant 0 : index
    %c0_20 = arith.constant 0 : index
    %20 = vector.load %arg11[%c0_19, %c0_20] : memref<16x1xf32, #tpu.memory_space<vmem>>, vector<16x1xf32>
    %c0_21 = arith.constant 0 : index
    %c0_22 = arith.constant 0 : index
    %21 = vector.load %arg12[%c0_21, %c0_22] : memref<8x16xf32, #tpu.memory_space<vmem>>, vector<8x16xf32>
    %c0_23 = arith.constant 0 : index
    %c0_24 = arith.constant 0 : index
    %22 = vector.load %arg13[%c0_23, %c0_24] : memref<16x16xf32, #tpu.memory_space<vmem>>, vector<16x16xf32>
    %c0_25 = arith.constant 0 : index
    %c0_26 = arith.constant 0 : index
    %23 = vector.load %arg14[%c0_25, %c0_26] : memref<1x16xf32, #tpu.memory_space<vmem>>, vector<1x16xf32>
    %c0_27 = arith.constant 0 : index
    %c0_28 = arith.constant 0 : index
    %24 = vector.load %arg15[%c0_27, %c0_28] : memref<16x8xf32, #tpu.memory_space<vmem>>, vector<16x8xf32>
    %c0_29 = arith.constant 0 : index
    %c0_30 = arith.constant 0 : index
    %25 = vector.load %arg16[%c0_29, %c0_30] : memref<1x8xf32, #tpu.memory_space<vmem>>, vector<1x8xf32>
    %c0_31 = arith.constant 0 : index
    %c0_32 = arith.constant 0 : index
    %26 = vector.load %arg0[%c0_31, %c0_32] : memref<16x3xf32, #tpu.memory_space<vmem>>, vector<16x3xf32>
    %c0_33 = arith.constant 0 : index
    %c0_34 = arith.constant 0 : index
    %27 = vector.load %arg1[%c0_33, %c0_34] : memref<16x8xf32, #tpu.memory_space<vmem>>, vector<16x8xf32>
    %c0_i32 = arith.constant 0 : i32
    %c3_i32 = arith.constant 3 : i32
    %28 = arith.addi %c0_i32, %c3_i32 : i32
    %c1_i32 = arith.constant 1 : i32
    %29:2 = scf.for %arg18 = %c0_i32 to %28 step %c1_i32 iter_args(%arg19 = %26, %arg20 = %27) -> (vector<16x3xf32>, vector<16x8xf32>)  : i32 {
      %33 = arith.mulf %arg19, %arg19 : vector<16x3xf32>
      %cst_38 = arith.constant dense<0.000000e+00> : vector<16xf32>
      %34 = vector.multi_reduction <add>, %33, %cst_38 [1] : vector<16x3xf32> to vector<16xf32>
      %35 = vector.shape_cast %34 : vector<16xf32> to vector<16x1xf32>
      %cst_39 = arith.constant dense<0.000000e+00> : vector<16x16xf32>
      %36 = tpu.matmul %arg19, %arg19, %cst_39 {dimension_numbers = #tpu.dot_dimension_numbers<[1], [1], [0], [0], [0, 0, 1, 0], [], []>} : vector<16x3xf32>, vector<16x3xf32>, vector<16x16xf32> -> vector<16x16xf32>
      %37 = tpu.transpose %35, [1, 0] : vector<16x1xf32> -> vector<1x16xf32>
      %38 = vector.broadcast %35 : vector<16x1xf32> to vector<16x16xf32>
      %39 = vector.broadcast %37 : vector<1x16xf32> to vector<16x16xf32>
      %40 = arith.addf %38, %39 : vector<16x16xf32>
      %cst_40 = arith.constant 2.000000e+00 : f32
      %41 = vector.broadcast %cst_40 : f32 to vector<16x16xf32>
      %42 = arith.mulf %41, %36 : vector<16x16xf32>
      %43 = arith.subf %40, %42 : vector<16x16xf32>
      %cst_41 = arith.constant 0.000000e+00 : f32
      %44 = vector.broadcast %cst_41 : f32 to vector<16x16xf32>
      %45 = arith.maximumf %43, %44 : vector<16x16xf32>
      %46 = math.sqrt %45 : vector<16x16xf32>
      %cst_42 = arith.constant 1.000000e+00 : f32
      %47 = vector.broadcast %cst_42 : f32 to vector<16x16xf32>
      %48 = arith.addf %46, %47 : vector<16x16xf32>
      %cst_43 = arith.constant 1.000000e+00 : f32
      %49 = vector.broadcast %cst_43 : f32 to vector<16x16xf32>
      %50 = arith.divf %49, %48 : vector<16x16xf32>
      %cst_44 = arith.constant dense<0.000000e+00> : vector<16x16xf32>
      %51 = tpu.matmul %arg20, %10, %cst_44 {dimension_numbers = #tpu.dot_dimension_numbers<[1], [0], [0], [1], [0, 0, 1, 1], [], []>} : vector<16x8xf32>, vector<8x16xf32>, vector<16x16xf32> -> vector<16x16xf32>
      %cst_45 = arith.constant dense<0.000000e+00> : vector<16x16xf32>
      %52 = tpu.matmul %arg20, %11, %cst_45 {dimension_numbers = #tpu.dot_dimension_numbers<[1], [0], [0], [1], [0, 0, 1, 1], [], []>} : vector<16x8xf32>, vector<8x16xf32>, vector<16x16xf32> -> vector<16x16xf32>
      %53 = vector.shape_cast %51 : vector<16x16xf32> to vector<16x1x16xf32>
      %54 = vector.shape_cast %52 : vector<16x16xf32> to vector<1x16x16xf32>
      %55 = vector.broadcast %53 : vector<16x1x16xf32> to vector<16x16x16xf32>
      %56 = vector.broadcast %54 : vector<1x16x16xf32> to vector<16x16x16xf32>
      %57 = arith.addf %55, %56 : vector<16x16x16xf32>
      %58 = vector.shape_cast %45 : vector<16x16xf32> to vector<16x16x1xf32>
      %59 = vector.broadcast %58 : vector<16x16x1xf32> to vector<16x16x16xf32>
      %60 = vector.broadcast %13 : vector<1x1x16xf32> to vector<16x16x16xf32>
      %61 = arith.mulf %59, %60 : vector<16x16x16xf32>
      %62 = arith.addf %57, %61 : vector<16x16x16xf32>
      %63 = vector.broadcast %15 : vector<1x1x16xf32> to vector<16x16x16xf32>
      %64 = arith.addf %62, %63 : vector<16x16x16xf32>
      %65 = math.tanh %64 : vector<16x16x16xf32>
      %66 = vector.shape_cast %65 : vector<16x16x16xf32> to vector<256x16xf32>
      %cst_46 = arith.constant dense<0.000000e+00> : vector<256x16xf32>
      %67 = tpu.matmul %66, %16, %cst_46 {dimension_numbers = #tpu.dot_dimension_numbers<[1], [0], [0], [1], [0, 0, 1, 1], [], []>} : vector<256x16xf32>, vector<16x16xf32>, vector<256x16xf32> -> vector<256x16xf32>
      %68 = vector.broadcast %17 : vector<1x16xf32> to vector<256x16xf32>
      %69 = arith.addf %67, %68 : vector<256x16xf32>
      %70 = math.tanh %69 : vector<256x16xf32>
      %cst_47 = arith.constant dense<0.000000e+00> : vector<256x16xf32>
      %71 = tpu.matmul %70, %18, %cst_47 {dimension_numbers = #tpu.dot_dimension_numbers<[1], [0], [0], [1], [0, 0, 1, 1], [], []>} : vector<256x16xf32>, vector<16x16xf32>, vector<256x16xf32> -> vector<256x16xf32>
      %72 = vector.broadcast %19 : vector<1x16xf32> to vector<256x16xf32>
      %73 = arith.addf %71, %72 : vector<256x16xf32>
      %74 = math.tanh %73 : vector<256x16xf32>
      %cst_48 = arith.constant dense<0.000000e+00> : vector<256x1xf32>
      %75 = tpu.matmul %74, %20, %cst_48 {dimension_numbers = #tpu.dot_dimension_numbers<[1], [0], [0], [1], [0, 0, 1, 1], [], []>} : vector<256x16xf32>, vector<16x1xf32>, vector<256x1xf32> -> vector<256x1xf32>
      %76 = math.tanh %75 : vector<256x1xf32>
      %77 = arith.mulf %0, %50 : vector<16x16xf32>
      %78 = vector.shape_cast %76 : vector<256x1xf32> to vector<16x16xf32>
      %79 = arith.mulf %77, %78 : vector<16x16xf32>
      %cst_49 = arith.constant dense<0.000000e+00> : vector<16xf32>
      %80 = vector.multi_reduction <add>, %79, %cst_49 [1] : vector<16x16xf32> to vector<16xf32>
      %81 = vector.shape_cast %80 : vector<16xf32> to vector<16x1xf32>
      %cst_50 = arith.constant dense<0.000000e+00> : vector<16x3xf32>
      %82 = tpu.matmul %79, %arg19, %cst_50 {dimension_numbers = #tpu.dot_dimension_numbers<[1], [0], [0], [1], [0, 0, 1, 1], [], []>} : vector<16x16xf32>, vector<16x3xf32>, vector<16x3xf32> -> vector<16x3xf32>
      %83 = vector.broadcast %81 : vector<16x1xf32> to vector<16x3xf32>
      %84 = arith.mulf %83, %arg19 : vector<16x3xf32>
      %85 = arith.subf %84, %82 : vector<16x3xf32>
      %86 = vector.broadcast %6 : vector<16x1xf32> to vector<16x3xf32>
      %87 = arith.mulf %85, %86 : vector<16x3xf32>
      %88 = arith.addf %arg19, %87 : vector<16x3xf32>
      %89 = vector.shape_cast %70 : vector<256x16xf32> to vector<16x16x16xf32>
      %90 = arith.mulf %89, %9 : vector<16x16x16xf32>
      %cst_51 = arith.constant dense<0.000000e+00> : vector<16x16xf32>
      %91 = vector.multi_reduction <add>, %90, %cst_51 [1] : vector<16x16x16xf32> to vector<16x16xf32>
      %cst_52 = arith.constant dense<0.000000e+00> : vector<16x16xf32>
      %92 = tpu.matmul %arg20, %21, %cst_52 {dimension_numbers = #tpu.dot_dimension_numbers<[1], [0], [0], [1], [0, 0, 1, 1], [], []>} : vector<16x8xf32>, vector<8x16xf32>, vector<16x16xf32> -> vector<16x16xf32>
      %cst_53 = arith.constant dense<0.000000e+00> : vector<16x16xf32>
      %93 = tpu.matmul %91, %22, %cst_53 {dimension_numbers = #tpu.dot_dimension_numbers<[1], [0], [0], [1], [0, 0, 1, 1], [], []>} : vector<16x16xf32>, vector<16x16xf32>, vector<16x16xf32> -> vector<16x16xf32>
      %94 = arith.addf %92, %93 : vector<16x16xf32>
      %95 = vector.broadcast %23 : vector<1x16xf32> to vector<16x16xf32>
      %96 = arith.addf %94, %95 : vector<16x16xf32>
      %97 = math.tanh %96 : vector<16x16xf32>
      %cst_54 = arith.constant dense<0.000000e+00> : vector<16x8xf32>
      %98 = tpu.matmul %97, %24, %cst_54 {dimension_numbers = #tpu.dot_dimension_numbers<[1], [0], [0], [1], [0, 0, 1, 1], [], []>} : vector<16x16xf32>, vector<16x8xf32>, vector<16x8xf32> -> vector<16x8xf32>
      %99 = arith.addf %arg20, %98 : vector<16x8xf32>
      %100 = vector.broadcast %25 : vector<1x8xf32> to vector<16x8xf32>
      %101 = arith.addf %99, %100 : vector<16x8xf32>
      %cst_55 = arith.constant dense<0.000000e+00> : vector<16xf32>
      %102 = vector.multi_reduction <add>, %101, %cst_55 [1] : vector<16x8xf32> to vector<16xf32>
      %103 = vector.shape_cast %102 : vector<16xf32> to vector<16x1xf32>
      %cst_56 = arith.constant 8.000000e+00 : f32
      %104 = vector.broadcast %cst_56 : f32 to vector<16x1xf32>
      %105 = arith.divf %103, %104 : vector<16x1xf32>
      %106 = vector.broadcast %105 : vector<16x1xf32> to vector<16x8xf32>
      %107 = arith.subf %101, %106 : vector<16x8xf32>
      %108 = arith.mulf %107, %107 : vector<16x8xf32>
      %cst_57 = arith.constant dense<0.000000e+00> : vector<16xf32>
      %109 = vector.multi_reduction <add>, %108, %cst_57 [1] : vector<16x8xf32> to vector<16xf32>
      %110 = vector.shape_cast %109 : vector<16xf32> to vector<16x1xf32>
      %cst_58 = arith.constant 8.000000e+00 : f32
      %111 = vector.broadcast %cst_58 : f32 to vector<16x1xf32>
      %112 = arith.divf %110, %111 : vector<16x1xf32>
      %cst_59 = arith.constant 9.99999974E-6 : f32
      %113 = vector.broadcast %cst_59 : f32 to vector<16x1xf32>
      %114 = arith.addf %112, %113 : vector<16x1xf32>
      %115 = math.sqrt %114 : vector<16x1xf32>
      %116 = math.sqrt %115 : vector<16x1xf32>
      %117 = vector.broadcast %116 : vector<16x1xf32> to vector<16x8xf32>
      %118 = arith.divf %101, %117 : vector<16x8xf32>
      scf.yield %88, %118 : vector<16x3xf32>, vector<16x8xf32>
    }
    %cst_35 = arith.constant 0.000000e+00 : f32
    %30 = vector.broadcast %cst_35 : f32 to vector<16x117xf32>
    %31 = tpu.concatenate %29#0, %29#1, %30 in 1 : vector<16x3xf32>, vector<16x8xf32>, vector<16x117xf32> -> vector<16x128xf32>
    %c0_36 = arith.constant 0 : index
    %c0_37 = arith.constant 0 : index
    %32 = vector.load %arg17[%c0_36, %c0_37] : memref<16x128xf32, #tpu.memory_space<vmem>>, vector<16x128xf32>
    tpu.vector_store %arg17[%c0_36, %c0_37], %31 {strides = array<i32>} : memref<16x128xf32, #tpu.memory_space<vmem>>, vector<16x128xf32>,
    return
  }
}

</mosaic_0001>

<llo_original>
// kernel: tpu_custom_call.1
$region0: #{tpu_custom_call.1}
  #allocation0 [shape = 'u32[]', space=smem, size = 0x4, offset = 0x4, fixed_abs, tag = 'smem constant byte address 0x4 - core index']
  #allocation1 [shape = 'u32[144,128]{1,0:T(1,128)}', space=vmem, size = 0x12000, scoped, tag = 'internal scratch']
  %s0 = inlined_call_operand.vmem [shape: f32[16,3], index: 0, kind: input, shape index: {}]
  %s1 = inlined_call_operand.vmem [shape: f32[16,8], index: 1, kind: input, shape index: {}]
  %s2 = inlined_call_operand.vmem [shape: f32[16,16], index: 2, kind: input, shape index: {}]
  %s3 = inlined_call_operand.vmem [shape: f32[8,16], index: 3, kind: input, shape index: {}]
  %s4 = inlined_call_operand.vmem [shape: f32[8,16], index: 4, kind: input, shape index: {}]
  %s5 = inlined_call_operand.vmem [shape: f32[1,16], index: 5, kind: input, shape index: {}]
  %s6 = inlined_call_operand.vmem [shape: f32[1,16], index: 6, kind: input, shape index: {}]
  %s7 = inlined_call_operand.vmem [shape: f32[16,16], index: 7, kind: input, shape index: {}]
  %s8 = inlined_call_operand.vmem [shape: f32[1,16], index: 8, kind: input, shape index: {}]
  %s9 = inlined_call_operand.vmem [shape: f32[16,16], index: 9, kind: input, shape index: {}]
  %s10 = inlined_call_operand.vmem [shape: f32[1,16], index: 10, kind: input, shape index: {}]
  %s11 = inlined_call_operand.vmem [shape: f32[16,1], index: 11, kind: input, shape index: {}]
  %s12 = inlined_call_operand.vmem [shape: f32[8,16], index: 12, kind: input, shape index: {}]
  %s13 = inlined_call_operand.vmem [shape: f32[16,16], index: 13, kind: input, shape index: {}]
  %s14 = inlined_call_operand.vmem [shape: f32[1,16], index: 14, kind: input, shape index: {}]
  %s15 = inlined_call_operand.vmem [shape: f32[16,8], index: 15, kind: input, shape index: {}]
  %s16 = inlined_call_operand.vmem [shape: f32[1,8], index: 16, kind: input, shape index: {}]
  %s17 = inlined_call_operand.hbm [shape: f32[16,128], index: 17, kind: output, shape index: {}]
  %s18 = sld [smem:[#allocation0]]
  $region85: #{tpu_custom_call.1} parent=0
    _
  %s20 = ssub.s32 1, %s18
  %s21 = scalar_select 0, %s20, %s18
  $region1: #{tpu_custom_call.1} parent=0
    #allocation2 [shape = 'u8[8192]{0}', space=vmem, size = 0x2000, scoped, tag = 'output window, operand 0, single buffered']
    #allocation3 [shape = 's32[1]{0}', space=sflag, size = 0x4, scoped, tag = 'scoped memory for tpu_custom_call.1']
    %22 = vsyncpa [#allocation3], 0
    // Predicated region
    $region2: #{tpu_custom_call.1} parent=1 // pred_check
      _
    $region3: #{tpu_custom_call.1} parent=1 // pred_check_branch
      %24 = sbr.rel (0) target = $region5
    $region4: #{tpu_custom_call.1} parent=1 // pred_region
      _
    $region5: #{tpu_custom_call.1} parent=1 // pred_fallthru
      _
    // Predicated region
    $region6: #{tpu_custom_call.1} parent=1 // pred_check
      _
    $region7: #{tpu_custom_call.1} parent=1 // pred_check_branch
      %26 = sbr.rel (0) target = $region9
    $region8: #{tpu_custom_call.1} parent=1 // pred_region
      _
    $region9: #{tpu_custom_call.1} parent=1 // pred_fallthru
      _
    // Predicated region
    $region10: #{tpu_custom_call.1} parent=1 // pred_check
      _
    $region11: #{tpu_custom_call.1} parent=1 // pred_check_branch
      %28 = sbr.rel (0) target = $region13
    $region12: #{tpu_custom_call.1} parent=1 // pred_region
      _
    $region13: #{tpu_custom_call.1} parent=1 // pred_fallthru
      _
    // Predicated region
    $region14: #{tpu_custom_call.1} parent=1 // pred_check
      _
    $region15: #{tpu_custom_call.1} parent=1 // pred_check_branch
      %30 = sbr.rel (0) target = $region17
    $region16: #{tpu_custom_call.1} parent=1 // pred_region
      _
    $region17: #{tpu_custom_call.1} parent=1 // pred_fallthru
      _
    // Predicated region
    $region18: #{tpu_custom_call.1} parent=1 // pred_check
      _
    $region19: #{tpu_custom_call.1} parent=1 // pred_check_branch
      %32 = sbr.rel (0) target = $region21
    $region20: #{tpu_custom_call.1} parent=1 // pred_region
      _
    $region21: #{tpu_custom_call.1} parent=1 // pred_fallthru
      _
    // Predicated region
    $region22: #{tpu_custom_call.1} parent=1 // pred_check
      _
    $region23: #{tpu_custom_call.1} parent=1 // pred_check_branch
      %34 = sbr.rel (0) target = $region25
    $region24: #{tpu_custom_call.1} parent=1 // pred_region
      _
    $region25: #{tpu_custom_call.1} parent=1 // pred_fallthru
      _
    // Predicated region
    $region26: #{tpu_custom_call.1} parent=1 // pred_check
      _
    $region27: #{tpu_custom_call.1} parent=1 // pred_check_branch
      %36 = sbr.rel (0) target = $region29
    $region28: #{tpu_custom_call.1} parent=1 // pred_region
      _
    $region29: #{tpu_custom_call.1} parent=1 // pred_fallthru
      _
    // Predicated region
    $region30: #{tpu_custom_call.1} parent=1 // pred_check
      _
    $region31: #{tpu_custom_call.1} parent=1 // pred_check_branch
      %38 = sbr.rel (0) target = $region33
    $region32: #{tpu_custom_call.1} parent=1 // pred_region
      _
    $region33: #{tpu_custom_call.1} parent=1 // pred_fallthru
      _
    // Predicated region
    $region34: #{tpu_custom_call.1} parent=1 // pred_check
      _
    $region35: #{tpu_custom_call.1} parent=1 // pred_check_branch
      %40 = sbr.rel (0) target = $region37
    $region36: #{tpu_custom_call.1} parent=1 // pred_region
      _
    $region37: #{tpu_custom_call.1} parent=1 // pred_fallthru
      _
    // Predicated region
    $region38: #{tpu_custom_call.1} parent=1 // pred_check
      _
    $region39: #{tpu_custom_call.1} parent=1 // pred_check_branch
      %42 = sbr.rel (0) target = $region41
    $region40: #{tpu_custom_call.1} parent=1 // pred_region
      _
    $region41: #{tpu_custom_call.1} parent=1 // pred_fallthru
      _
    // Predicated region
    $region42: #{tpu_custom_call.1} parent=1 // pred_check
      _
    $region43: #{tpu_custom_call.1} parent=1 // pred_check_branch
      %44 = sbr.rel (0) target = $region45
    $region44: #{tpu_custom_call.1} parent=1 // pred_region
      _
    $region45: #{tpu_custom_call.1} parent=1 // pred_fallthru
      _
    // Predicated region
    $region46: #{tpu_custom_call.1} parent=1 // pred_check
      _
    $region47: #{tpu_custom_call.1} parent=1 // pred_check_branch
      %46 = sbr.rel (0) target = $region49
    $region48: #{tpu_custom_call.1} parent=1 // pred_region
      _
    $region49: #{tpu_custom_call.1} parent=1 // pred_fallthru
      _
    // Predicated region
    $region50: #{tpu_custom_call.1} parent=1 // pred_check
      _
    $region51: #{tpu_custom_call.1} parent=1 // pred_check_branch
      %48 = sbr.rel (0) target = $region53
    $region52: #{tpu_custom_call.1} parent=1 // pred_region
      _
    $region53: #{tpu_custom_call.1} parent=1 // pred_fallthru
      _
    // Predicated region
    $region54: #{tpu_custom_call.1} parent=1 // pred_check
      _
    $region55: #{tpu_custom_call.1} parent=1 // pred_check_branch
      %50 = sbr.rel (0) target = $region57
    $region56: #{tpu_custom_call.1} parent=1 // pred_region
      _
    $region57: #{tpu_custom_call.1} parent=1 // pred_fallthru
      _
    // Predicated region
    $region58: #{tpu_custom_call.1} parent=1 // pred_check
      _
    $region59: #{tpu_custom_call.1} parent=1 // pred_check_branch
      %52 = sbr.rel (0) target = $region61
    $region60: #{tpu_custom_call.1} parent=1 // pred_region
      _
    $region61: #{tpu_custom_call.1} parent=1 // pred_fallthru
      _
    // Predicated region
    $region62: #{tpu_custom_call.1} parent=1 // pred_check
      _
    $region63: #{tpu_custom_call.1} parent=1 // pred_check_branch
      %54 = sbr.rel (0) target = $region65
    $region64: #{tpu_custom_call.1} parent=1 // pred_region
      _
    $region65: #{tpu_custom_call.1} parent=1 // pred_fallthru
      _
    // Predicated region
    $region66: #{tpu_custom_call.1} parent=1 // pred_check
      _
    $region67: #{tpu_custom_call.1} parent=1 // pred_check_branch
      %56 = sbr.rel (0) target = $region69
    $region68: #{tpu_custom_call.1} parent=1 // pred_region
      _
    $region69: #{tpu_custom_call.1} parent=1 // pred_fallthru
      _
    %v57 = vld [vmem:[%s2] sm:$0xff]
    %v58 = vld [vmem:[%s2 + $0x8] sm:$0xff]
    %vm59 = vcmask 130048
    %v60 = vsel %vm59, %v57, 0.0
    %61 = vadd.xlane.f32.xlu0 %v60
    %v62 = vpop.xlane.xlu0 %61
    %v63 = vsel %vm59, %v58, 0.0
    %64 = vadd.xlane.f32.xlu0 %v63
    %v65 = vpop.xlane.xlu0 %64
    %v66 = vmax.f32 %v62, 1.0
    %v67 = vmax.f32 %v65, 1.0
    %v68 = vrcp.pop %v66
    %v69 = vmul.f32 1.0, %v68
    %v70 = vrcp.pop %v67
    %v71 = vmul.f32 1.0, %v70
    %v72 = vlaneseq
    %v73 = vshrl.u32 %v72, 7
    %v74 = vsub.s32 0, %v73
    %v75 = vrot.slane %v57, %v74
    %77 = vbcast.lane.b32.xlu0 %v75, 256
    %v78 = vpop.permute.xlu0 %77
    %s80 = sor.u32 256, 8
    %81 = vbcast.lane.b32.xlu0 %v75, %s80
    %v82 = vpop.permute.xlu0 %81
    %v83 = vlaneseq
    %v84 = vshrl.u32 %v83, 7
    %v85 = vsub.s32 1, %v84
    %v86 = vrot.slane %v57, %v85
    %88 = vbcast.lane.b32.xlu0 %v86, 256
    %v89 = vpop.permute.xlu0 %88
    %s91 = sor.u32 256, 8
    %92 = vbcast.lane.b32.xlu0 %v86, %s91
    %v93 = vpop.permute.xlu0 %92
    %v94 = vlaneseq
    %v95 = vshrl.u32 %v94, 7
    %v96 = vsub.s32 2, %v95
    %v97 = vrot.slane %v57, %v96
    %99 = vbcast.lane.b32.xlu0 %v97, 256
    %v100 = vpop.permute.xlu0 %99
    %s102 = sor.u32 256, 8
    %103 = vbcast.lane.b32.xlu0 %v97, %s102
    %v104 = vpop.permute.xlu0 %103
    %v105 = vlaneseq
    %v106 = vshrl.u32 %v105, 7
    %v107 = vsub.s32 3, %v106
    %v108 = vrot.slane %v57, %v107
    %110 = vbcast.lane.b32.xlu0 %v108, 256
    %v111 = vpop.permute.xlu0 %110
    %s113 = sor.u32 256, 8
    %114 = vbcast.lane.b32.xlu0 %v108, %s113
    %v115 = vpop.permute.xlu0 %114
    %v116 = vlaneseq
    %v117 = vshrl.u32 %v116, 7
    %v118 = vsub.s32 4, %v117
    %v119 = vrot.slane %v57, %v118
    %121 = vbcast.lane.b32.xlu0 %v119, 256
    %v122 = vpop.permute.xlu0 %121
    %s124 = sor.u32 256, 8
    %125 = vbcast.lane.b32.xlu0 %v119, %s124
    %v126 = vpop.permute.xlu0 %125
    %v127 = vlaneseq
    %v128 = vshrl.u32 %v127, 7
    %v129 = vsub.s32 5, %v128
    %v130 = vrot.slane %v57, %v129
    %132 = vbcast.lane.b32.xlu0 %v130, 256
    %v133 = vpop.permute.xlu0 %132
    %s135 = sor.u32 256, 8
    %136 = vbcast.lane.b32.xlu0 %v130, %s135
    %v137 = vpop.permute.xlu0 %136
    %v138 = vlaneseq
    %v139 = vshrl.u32 %v138, 7
    %v140 = vsub.s32 6, %v139
    %v141 = vrot.slane %v57, %v140
    %143 = vbcast.lane.b32.xlu0 %v141, 256
    %v144 = vpop.permute.xlu0 %143
    %s146 = sor.u32 256, 8
    %147 = vbcast.lane.b32.xlu0 %v141, %s146
    %v148 = vpop.permute.xlu0 %147
    %v149 = vlaneseq
    %v150 = vshrl.u32 %v149, 7
    %v151 = vsub.s32 7, %v150
    %v152 = vrot.slane %v57, %v151
    %154 = vbcast.lane.b32.xlu0 %v152, 256
    %v155 = vpop.permute.xlu0 %154
    %s157 = sor.u32 256, 8
    %158 = vbcast.lane.b32.xlu0 %v152, %s157
    %v159 = vpop.permute.xlu0 %158
    %v160 = vlaneseq
    %v161 = vshrl.u32 %v160, 7
    %v162 = vsub.s32 0, %v161
    %v163 = vrot.slane %v58, %v162
    %165 = vbcast.lane.b32.xlu0 %v163, 256
    %v166 = vpop.permute.xlu0 %165
    %s168 = sor.u32 256, 8
    %169 = vbcast.lane.b32.xlu0 %v163, %s168
    %v170 = vpop.permute.xlu0 %169
    %v171 = vlaneseq
    %v172 = vshrl.u32 %v171, 7
    %v173 = vsub.s32 1, %v172
    %v174 = vrot.slane %v58, %v173
    %176 = vbcast.lane.b32.xlu0 %v174, 256
    %v177 = vpop.permute.xlu0 %176
    %s179 = sor.u32 256, 8
    %180 = vbcast.lane.b32.xlu0 %v174, %s179
    %v181 = vpop.permute.xlu0 %180
    %v182 = vlaneseq
    %v183 = vshrl.u32 %v182, 7
    %v184 = vsub.s32 2, %v183
    %v185 = vrot.slane %v58, %v184
    %187 = vbcast.lane.b32.xlu0 %v185, 256
    %v188 = vpop.permute.xlu0 %187
    %s190 = sor.u32 256, 8
    %191 = vbcast.lane.b32.xlu0 %v185, %s190
    %v192 = vpop.permute.xlu0 %191
    %v193 = vlaneseq
    %v194 = vshrl.u32 %v193, 7
    %v195 = vsub.s32 3, %v194
    %v196 = vrot.slane %v58, %v195
    %198 = vbcast.lane.b32.xlu0 %v196, 256
    %v199 = vpop.permute.xlu0 %198
    %s201 = sor.u32 256, 8
    %202 = vbcast.lane.b32.xlu0 %v196, %s201
    %v203 = vpop.permute.xlu0 %202
    %v204 = vlaneseq
    %v205 = vshrl.u32 %v204, 7
    %v206 = vsub.s32 4, %v205
    %v207 = vrot.slane %v58, %v206
    %209 = vbcast.lane.b32.xlu0 %v207, 256
    %v210 = vpop.permute.xlu0 %209
    %s212 = sor.u32 256, 8
    %213 = vbcast.lane.b32.xlu0 %v207, %s212
    %v214 = vpop.permute.xlu0 %213
    %v215 = vlaneseq
    %v216 = vshrl.u32 %v215, 7
    %v217 = vsub.s32 5, %v216
    %v218 = vrot.slane %v58, %v217
    %220 = vbcast.lane.b32.xlu0 %v218, 256
    %v221 = vpop.permute.xlu0 %220
    %s223 = sor.u32 256, 8
    %224 = vbcast.lane.b32.xlu0 %v218, %s223
    %v225 = vpop.permute.xlu0 %224
    %v226 = vlaneseq
    %v227 = vshrl.u32 %v226, 7
    %v228 = vsub.s32 6, %v227
    %v229 = vrot.slane %v58, %v228
    %231 = vbcast.lane.b32.xlu0 %v229, 256
    %v232 = vpop.permute.xlu0 %231
    %s234 = sor.u32 256, 8
    %235 = vbcast.lane.b32.xlu0 %v229, %s234
    %v236 = vpop.permute.xlu0 %235
    %v237 = vlaneseq
    %v238 = vshrl.u32 %v237, 7
    %v239 = vsub.s32 7, %v238
    %v240 = vrot.slane %v58, %v239
    %242 = vbcast.lane.b32.xlu0 %v240, 256
    %v243 = vpop.permute.xlu0 %242
    %s245 = sor.u32 256, 8
    %246 = vbcast.lane.b32.xlu0 %v240, %s245
    %v247 = vpop.permute.xlu0 %246
    %v248 = vld [vmem:[%s3] sm:$0xff]
    %v249 = vld [vmem:[%s4] sm:$0xff]
    %v250 = vld [vmem:[%s5] sm:$0x1]
    %v251 = vld [vmem:[%s6] sm:$0x1]
    %v252 = vld [vmem:[%s7] sm:$0xff]
    %v253 = vld [vmem:[%s7 + $0x8] sm:$0xff]
    %v254 = vld [vmem:[%s8] sm:$0x1]
    %v255 = vld [vmem:[%s9] sm:$0xff]
    %v256 = vld [vmem:[%s9 + $0x8] sm:$0xff]
    %v257 = vld [vmem:[%s10] sm:$0x1]
    %v258 = vld [vmem:[%s11] sm:$0xff]
    %v259 = vld [vmem:[%s11 + $0x8] sm:$0xff]
    %v260 = vld [vmem:[%s12] sm:$0xff]
    %v261 = vld [vmem:[%s13] sm:$0xff]
    %v262 = vld [vmem:[%s13 + $0x8] sm:$0xff]
    %v263 = vld [vmem:[%s14] sm:$0x1]
    %v264 = vld [vmem:[%s15] sm:$0xff]
    %v265 = vld [vmem:[%s15 + $0x8] sm:$0xff]
    %v266 = vld [vmem:[%s16] sm:$0x1]
    %v267 = vld [vmem:[%s0] sm:$0xff]
    %v268 = vld [vmem:[%s0 + $0x8] sm:$0xff]
    %v269 = vld [vmem:[%s1] sm:$0xff]
    %v270 = vld [vmem:[%s1 + $0x8] sm:$0xff]
    loop: start=0, step=1, limit=3
    $region70: #{tpu_custom_call.1} parent=1 // loop_pre_header
      _
    $region71: #{tpu_custom_call.1} parent=1 // loop_header
      %s272 = sphi 0, %s276
      %p273 = scmp.ge.s32.totalorder %s272, 3
      %v277 = vphi %v267, %v2587
      %v278 = vphi %v268, %v2588
      %v279 = vphi %v269, %v3102
      %v280 = vphi %v270, %v3104
    $region72: #{tpu_custom_call.1} parent=1 // loop_header_branch
      %275 = sbr.rel (%p273) target = $region76
    $region73: #{tpu_custom_call.1} parent=1 // loop_body
      %v281 = vmul.f32 %v277, %v277
      %v282 = vmul.f32 %v278, %v278
      %vm283 = vcmask 23552
      %v284 = vsel %vm283, %v281, 0.0
      %285 = vadd.xlane.f32.xlu0 %v284
      %v286 = vpop.xlane.xlu0 %285
      %v287 = vsel %vm283, %v282, 0.0
      %288 = vadd.xlane.f32.xlu0 %v287
      %v289 = vpop.xlane.xlu0 %288
      %v291 = vsel %vm283, %v277, 0
      %v294 = vsel %vm283, %v278, 0
      %296 = vmatprep.subr.mxu0 0.0
      %297 = vmatpush1.xpose.msra.mxu0 %v291
      %298 = vmatprep.subr.mxu0 0.0
      %299 = vmatpush1.xpose.msra.mxu0 %v294
      %300 = vmatprep.subr.mxu0 0.0
      %301 = vmatpush1.xpose.msra.mxu0 0.0
      %302 = vmatprep.subr.mxu0 0.0
      %303 = vmatpush1.xpose.msra.mxu0 0.0
      %304 = vmatprep.subr.mxu0 0.0
      %305 = vmatpush1.xpose.msra.mxu0 0.0
      %306 = vmatprep.subr.mxu0 0.0
      %307 = vmatpush1.xpose.msra.mxu0 0.0
      %308 = vmatprep.subr.mxu0 0.0
      %309 = vmatpush1.xpose.msra.mxu0 0.0
      %310 = vmatprep.subr.mxu0 0.0
      %311 = vmatpush1.xpose.msra.mxu0 0.0
      %312 = vmatprep.subr.mxu0 0.0
      %313 = vmatpush1.xpose.msra.mxu0 0.0
      %314 = vmatprep.subr.mxu0 0.0
      %315 = vmatpush1.xpose.msra.mxu0 0.0
      %316 = vmatprep.subr.mxu0 0.0
      %317 = vmatpush1.xpose.msra.mxu0 0.0
      %318 = vmatprep.subr.mxu0 0.0
      %319 = vmatpush1.xpose.msra.mxu0 0.0
      %320 = vmatprep.subr.mxu0 0.0
      %321 = vmatpush1.xpose.msra.mxu0 0.0
      %322 = vmatprep.subr.mxu0 0.0
      %323 = vmatpush1.xpose.msra.mxu0 0.0
      %324 = vmatprep.subr.mxu0 0.0
      %325 = vmatpush1.xpose.msra.mxu0 0.0
      %326 = vmatprep.subr.mxu0 0.0
      %327 = vmatpush1.xpose.msra.mxu0 0.0
      %328 = vmatprep.subr.mxu0 0.0
      %329 = vmatpush1.xpose.msra.mxu0 0.0
      %330 = vmatprep.subr.mxu0 0.0
      %331 = vmatpush1.xpose.msra.mxu0 0.0
      %332 = vmatprep.subr.mxu0 0.0
      %333 = vmatpush1.xpose.msra.mxu0 0.0
      %334 = vmatprep.subr.mxu0 0.0
      %335 = vmatpush1.xpose.msra.mxu0 0.0
      %336 = vmatprep.subr.mxu0 0.0
      %337 = vmatpush1.xpose.msra.mxu0 0.0
      %338 = vmatprep.subr.mxu0 0.0
      %339 = vmatpush1.xpose.msra.mxu0 0.0
      %340 = vmatprep.subr.mxu0 0.0
      %341 = vmatpush1.xpose.msra.mxu0 0.0
      %342 = vmatprep.subr.mxu0 0.0
      %343 = vmatpush1.xpose.msra.mxu0 0.0
      %344 = vmatprep.subr.mxu0 0.0
      %345 = vmatpush1.xpose.msra.mxu0 0.0
      %346 = vmatprep.subr.mxu0 0.0
      %347 = vmatpush1.xpose.msra.mxu0 0.0
      %348 = vmatprep.subr.mxu0 0.0
      %349 = vmatpush1.xpose.msra.mxu0 0.0
      %350 = vmatprep.subr.mxu0 0.0
      %351 = vmatpush1.xpose.msra.mxu0 0.0
      %352 = vmatprep.subr.mxu0 0.0
      %353 = vmatpush1.xpose.msra.mxu0 0.0
      %354 = vmatprep.subr.mxu0 0.0
      %355 = vmatpush1.xpose.msra.mxu0 0.0
      %356 = vmatprep.subr.mxu0 0.0
      %357 = vmatpush1.xpose.msra.mxu0 0.0
      %358 = vmatprep.subr.mxu0 0.0
      %359 = vmatpush1.xpose.msra.mxu0 0.0
      %360 = vmatprep.mubr.f32.mxu0 0.0
      %361 = vmatmul.mubr.f32.gmra.mrb[0].mxu0 %v291
      %v362 = vpop.f32.mrb[0].mxu0
      %v363 = vadd.f32 0.0, %v362
      %v364 = vpop.f32.mrb[0].mxu0
      %365 = vmatprep.mubr.f32.mxu0 0.0
      %366 = vmatmul.mubr.f32.gmra.mrb[0].mxu0 %v294
      %v367 = vpop.f32.mrb[0].mxu0
      %v368 = vadd.f32 0.0, %v367
      %v369 = vpop.f32.mrb[0].mxu0
      %370 = vdwg.mxu0
      %371 = vxpose.xlu0.b32.start [1/16] %v286, 128
      %372 = vxpose.xlu0.b32.cont [2/16] %v289, 128
      %373 = vxpose.xlu0.b32.cont [3/16] 0.0, 128
      %374 = vxpose.xlu0.b32.cont [4/16] 0.0, 128
      %375 = vxpose.xlu0.b32.cont [5/16] 0.0, 128
      %376 = vxpose.xlu0.b32.cont [6/16] 0.0, 128
      %377 = vxpose.xlu0.b32.cont [7/16] 0.0, 128
      %378 = vxpose.xlu0.b32.cont [8/16] 0.0, 128
      %379 = vxpose.xlu0.b32.cont [9/16] 0.0, 128
      %380 = vxpose.xlu0.b32.cont [10/16] 0.0, 128
      %381 = vxpose.xlu0.b32.cont [11/16] 0.0, 128
      %382 = vxpose.xlu0.b32.cont [12/16] 0.0, 128
      %383 = vxpose.xlu0.b32.cont [13/16] 0.0, 128
      %384 = vxpose.xlu0.b32.cont [14/16] 0.0, 128
      %385 = vxpose.xlu0.b32.cont [15/16] 0.0, 128
      %386 = vxpose.xlu0.b32.end [16/16] 0.0, 128
      %v387 = vpop.trf.xlu0
      %v388 = vpop.trf.xlu0
      %v389 = vpop.trf.xlu0
      %v390 = vpop.trf.xlu0
      %v391 = vpop.trf.xlu0
      %v392 = vpop.trf.xlu0
      %v393 = vpop.trf.xlu0
      %v394 = vpop.trf.xlu0
      %v395 = vpop.trf.xlu0
      %v396 = vpop.trf.xlu0
      %v397 = vpop.trf.xlu0
      %v398 = vpop.trf.xlu0
      %v399 = vpop.trf.xlu0
      %v400 = vpop.trf.xlu0
      %v401 = vpop.trf.xlu0
      %v402 = vpop.trf.xlu0
      %v403 = vlaneseq
      %v404 = vshrl.u32 %v403, 7
      %v405 = vsub.s32 0, %v404
      %v406 = vrot.slane %v387, %v405
      %v407 = vadd.f32 %v286, %v406
      %v408 = vadd.f32 %v289, %v406
      %v409 = vmul.f32 %v363, 2.0
      %v410 = vmul.f32 %v368, 2.0
      %v411 = vsub.f32 %v407, %v409
      %v412 = vsub.f32 %v408, %v410
      %v413 = vmax.f32 %v411, 0.0
      %v414 = vmax.f32 %v412, 0.0
      %v415 = vrsqrt.pop %v413
      %v416 = vmul.f32 %v413, %v415
      %vm417 = vcmp.eq.f32.partialorder %v413, inf
      %v418 = vsel %vm417, %v413, %v416
      %vm419 = vcmp.eq.f32.partialorder %v413, 0.0
      %v420 = vand.u32 %v413, 2147483648
      %v421 = vsel %vm419, %v420, %v418
      %v422 = vrsqrt.pop %v414
      %v423 = vmul.f32 %v414, %v422
      %vm424 = vcmp.eq.f32.partialorder %v414, inf
      %v425 = vsel %vm424, %v414, %v423
      %vm426 = vcmp.eq.f32.partialorder %v414, 0.0
      %v427 = vand.u32 %v414, 2147483648
      %v428 = vsel %vm426, %v427, %v425
      %v429 = vadd.f32 %v421, 1.0
      %v430 = vadd.f32 %v428, 1.0
      %v431 = vrcp.pop %v429
      %v432 = vmul.f32 1.0, %v431
      %v433 = vrcp.pop %v430
      %v434 = vmul.f32 1.0, %v433
      %vm435 = vcmask 64512
      %v437 = vsel %vm435, %v279, 0
      %v440 = vsel %vm435, %v280, 0
      %442 = vmatprep.subr.mxu0 0.0
      %443 = vmatpush1.msra.mxu0 %v248
      %444 = vmatprep.subr.mxu0 0.0
      %445 = vmatpush1.msra.mxu0 0.0
      %446 = vmatprep.subr.mxu0 0.0
      %447 = vmatpush1.msra.mxu0 0.0
      %448 = vmatprep.subr.mxu0 0.0
      %449 = vmatpush1.msra.mxu0 0.0
      %450 = vmatprep.subr.mxu0 0.0
      %451 = vmatpush1.msra.mxu0 0.0
      %452 = vmatprep.subr.mxu0 0.0
      %453 = vmatpush1.msra.mxu0 0.0
      %454 = vmatprep.subr.mxu0 0.0
      %455 = vmatpush1.msra.mxu0 0.0
      %456 = vmatprep.subr.mxu0 0.0
      %457 = vmatpush1.msra.mxu0 0.0
      %458 = vmatprep.subr.mxu0 0.0
      %459 = vmatpush1.msra.mxu0 0.0
      %460 = vmatprep.subr.mxu0 0.0
      %461 = vmatpush1.msra.mxu0 0.0
      %462 = vmatprep.subr.mxu0 0.0
      %463 = vmatpush1.msra.mxu0 0.0
      %464 = vmatprep.subr.mxu0 0.0
      %465 = vmatpush1.msra.mxu0 0.0
      %466 = vmatprep.subr.mxu0 0.0
      %467 = vmatpush1.msra.mxu0 0.0
      %468 = vmatprep.subr.mxu0 0.0
      %469 = vmatpush1.msra.mxu0 0.0
      %470 = vmatprep.subr.mxu0 0.0
      %471 = vmatpush1.msra.mxu0 0.0
      %472 = vmatprep.subr.mxu0 0.0
      %473 = vmatpush1.msra.mxu0 0.0
      %474 = vmatprep.subr.mxu0 0.0
      %475 = vmatpush1.msra.mxu0 0.0
      %476 = vmatprep.subr.mxu0 0.0
      %477 = vmatpush1.msra.mxu0 0.0
      %478 = vmatprep.subr.mxu0 0.0
      %479 = vmatpush1.msra.mxu0 0.0
      %480 = vmatprep.subr.mxu0 0.0
      %481 = vmatpush1.msra.mxu0 0.0
      %482 = vmatprep.subr.mxu0 0.0
      %483 = vmatpush1.msra.mxu0 0.0
      %484 = vmatprep.subr.mxu0 0.0
      %485 = vmatpush1.msra.mxu0 0.0
      %486 = vmatprep.subr.mxu0 0.0
      %487 = vmatpush1.msra.mxu0 0.0
      %488 = vmatprep.subr.mxu0 0.0
      %489 = vmatpush1.msra.mxu0 0.0
      %490 = vmatprep.subr.mxu0 0.0
      %491 = vmatpush1.msra.mxu0 0.0
      %492 = vmatprep.subr.mxu0 0.0
      %493 = vmatpush1.msra.mxu0 0.0
      %494 = vmatprep.subr.mxu0 0.0
      %495 = vmatpush1.msra.mxu0 0.0
      %496 = vmatprep.subr.mxu0 0.0
      %497 = vmatpush1.msra.mxu0 0.0
      %498 = vmatprep.subr.mxu0 0.0
      %499 = vmatpush1.msra.mxu0 0.0
      %500 = vmatprep.subr.mxu0 0.0
      %501 = vmatpush1.msra.mxu0 0.0
      %502 = vmatprep.subr.mxu0 0.0
      %503 = vmatpush1.msra.mxu0 0.0
      %504 = vmatprep.subr.mxu0 0.0
      %505 = vmatpush1.msra.mxu0 0.0
      %506 = vmatprep.mubr.f32.mxu0 0.0
      %507 = vmatmul.mubr.f32.gmra.mrb[0].mxu0 %v437
      %v508 = vpop.f32.mrb[0].mxu0
      %v509 = vadd.f32 0.0, %v508
      %v510 = vpop.f32.mrb[0].mxu0
      %511 = vmatprep.mubr.f32.mxu0 0.0
      %512 = vmatmul.mubr.f32.gmra.mrb[0].mxu0 %v440
      %v513 = vpop.f32.mrb[0].mxu0
      %v514 = vadd.f32 0.0, %v513
      %v515 = vpop.f32.mrb[0].mxu0
      %516 = vdwg.mxu0
      %517 = vmatprep.subr.mxu0 0.0
      %518 = vmatpush1.msra.mxu0 %v249
      %519 = vmatprep.subr.mxu0 0.0
      %520 = vmatpush1.msra.mxu0 0.0
      %521 = vmatprep.subr.mxu0 0.0
      %522 = vmatpush1.msra.mxu0 0.0
      %523 = vmatprep.subr.mxu0 0.0
      %524 = vmatpush1.msra.mxu0 0.0
      %525 = vmatprep.subr.mxu0 0.0
      %526 = vmatpush1.msra.mxu0 0.0
      %527 = vmatprep.subr.mxu0 0.0
      %528 = vmatpush1.msra.mxu0 0.0
      %529 = vmatprep.subr.mxu0 0.0
      %530 = vmatpush1.msra.mxu0 0.0
      %531 = vmatprep.subr.mxu0 0.0
      %532 = vmatpush1.msra.mxu0 0.0
      %533 = vmatprep.subr.mxu0 0.0
      %534 = vmatpush1.msra.mxu0 0.0
      %535 = vmatprep.subr.mxu0 0.0
      %536 = vmatpush1.msra.mxu0 0.0
      %537 = vmatprep.subr.mxu0 0.0
      %538 = vmatpush1.msra.mxu0 0.0
      %539 = vmatprep.subr.mxu0 0.0
      %540 = vmatpush1.msra.mxu0 0.0
      %541 = vmatprep.subr.mxu0 0.0
      %542 = vmatpush1.msra.mxu0 0.0
      %543 = vmatprep.subr.mxu0 0.0
      %544 = vmatpush1.msra.mxu0 0.0
      %545 = vmatprep.subr.mxu0 0.0
      %546 = vmatpush1.msra.mxu0 0.0
      %547 = vmatprep.subr.mxu0 0.0
      %548 = vmatpush1.msra.mxu0 0.0
      %549 = vmatprep.subr.mxu0 0.0
      %550 = vmatpush1.msra.mxu0 0.0
      %551 = vmatprep.subr.mxu0 0.0
      %552 = vmatpush1.msra.mxu0 0.0
      %553 = vmatprep.subr.mxu0 0.0
      %554 = vmatpush1.msra.mxu0 0.0
      %555 = vmatprep.subr.mxu0 0.0
      %556 = vmatpush1.msra.mxu0 0.0
      %557 = vmatprep.subr.mxu0 0.0
      %558 = vmatpush1.msra.mxu0 0.0
      %559 = vmatprep.subr.mxu0 0.0
      %560 = vmatpush1.msra.mxu0 0.0
      %561 = vmatprep.subr.mxu0 0.0
      %562 = vmatpush1.msra.mxu0 0.0
      %563 = vmatprep.subr.mxu0 0.0
      %564 = vmatpush1.msra.mxu0 0.0
      %565 = vmatprep.subr.mxu0 0.0
      %566 = vmatpush1.msra.mxu0 0.0
      %567 = vmatprep.subr.mxu0 0.0
      %568 = vmatpush1.msra.mxu0 0.0
      %569 = vmatprep.subr.mxu0 0.0
      %570 = vmatpush1.msra.mxu0 0.0
      %571 = vmatprep.subr.mxu0 0.0
      %572 = vmatpush1.msra.mxu0 0.0
      %573 = vmatprep.subr.mxu0 0.0
      %574 = vmatpush1.msra.mxu0 0.0
      %575 = vmatprep.subr.mxu0 0.0
      %576 = vmatpush1.msra.mxu0 0.0
      %577 = vmatprep.subr.mxu0 0.0
      %578 = vmatpush1.msra.mxu0 0.0
      %579 = vmatprep.subr.mxu0 0.0
      %580 = vmatpush1.msra.mxu0 0.0
      %581 = vmatprep.mubr.f32.mxu0 0.0
      %582 = vmatmul.mubr.f32.gmra.mrb[0].mxu0 %v437
      %v583 = vpop.f32.mrb[0].mxu0
      %v584 = vadd.f32 0.0, %v583
      %v585 = vpop.f32.mrb[0].mxu0
      %586 = vmatprep.mubr.f32.mxu0 0.0
      %587 = vmatmul.mubr.f32.gmra.mrb[0].mxu0 %v440
      %v588 = vpop.f32.mrb[0].mxu0
      %v589 = vadd.f32 0.0, %v588
      %v590 = vpop.f32.mrb[0].mxu0
      %591 = vdwg.mxu0
      %v594 = vcombine.high %v509, %v509
      %v596 = vunpack.c.l.s4 1966171168
      %v597 = vunpack.c.0.s8 %v596
      %v598 = vlaneseq
      %v599 = vshrl.u32 %v598, 7
      %v600 = vsub.s32 %v597, %v599
      %v601 = vrot.slane %v509, %v600
      %v603 = vunpack.c.l.s4 1966171168
      %v604 = vunpack.c.0.s8 %v603
      %v605 = vlaneseq
      %v606 = vshrl.u32 %v605, 7
      %v607 = vsub.s32 %v604, %v606
      %v608 = vrot.slane %v594, %v607
      %v609 = vcombine.high %v601, %v601
      %v610 = vcombine.high %v608, %v608
      %v612 = vunpack.c.l.s4 1966171168
      %v613 = vunpack.c.0.s8 %v612
      %v614 = vlaneseq
      %v615 = vshrl.u32 %v614, 7
      %v616 = vsub.s32 %v613, %v615
      %v617 = vrot.slane %v601, %v616
      %v619 = vunpack.c.l.s4 1966171168
      %v620 = vunpack.c.0.s8 %v619
      %v621 = vlaneseq
      %v622 = vshrl.u32 %v621, 7
      %v623 = vsub.s32 %v620, %v622
      %v624 = vrot.slane %v608, %v623
      %v626 = vunpack.c.l.s4 1966171168
      %v627 = vunpack.c.0.s8 %v626
      %v628 = vlaneseq
      %v629 = vshrl.u32 %v628, 7
      %v630 = vsub.s32 %v627, %v629
      %v631 = vrot.slane %v609, %v630
      %v633 = vunpack.c.l.s4 1966171168
      %v634 = vunpack.c.0.s8 %v633
      %v635 = vlaneseq
      %v636 = vshrl.u32 %v635, 7
      %v637 = vsub.s32 %v634, %v636
      %v638 = vrot.slane %v610, %v637
      %v639 = vcombine.high %v617, %v617
      %v640 = vcombine.high %v624, %v624
      %v641 = vcombine.high %v631, %v631
      %v642 = vcombine.high %v638, %v638
      %v643 = vcombine.high %v514, %v514
      %v645 = vunpack.c.l.s4 1966171168
      %v646 = vunpack.c.0.s8 %v645
      %v647 = vlaneseq
      %v648 = vshrl.u32 %v647, 7
      %v649 = vsub.s32 %v646, %v648
      %v650 = vrot.slane %v514, %v649
      %v652 = vunpack.c.l.s4 1966171168
      %v653 = vunpack.c.0.s8 %v652
      %v654 = vlaneseq
      %v655 = vshrl.u32 %v654, 7
      %v656 = vsub.s32 %v653, %v655
      %v657 = vrot.slane %v643, %v656
      %v658 = vcombine.high %v650, %v650
      %v659 = vcombine.high %v657, %v657
      %v661 = vunpack.c.l.s4 1966171168
      %v662 = vunpack.c.0.s8 %v661
      %v663 = vlaneseq
      %v664 = vshrl.u32 %v663, 7
      %v665 = vsub.s32 %v662, %v664
      %v666 = vrot.slane %v650, %v665
      %v668 = vunpack.c.l.s4 1966171168
      %v669 = vunpack.c.0.s8 %v668
      %v670 = vlaneseq
      %v671 = vshrl.u32 %v670, 7
      %v672 = vsub.s32 %v669, %v671
      %v673 = vrot.slane %v657, %v672
      %v675 = vunpack.c.l.s4 1966171168
      %v676 = vunpack.c.0.s8 %v675
      %v677 = vlaneseq
      %v678 = vshrl.u32 %v677, 7
      %v679 = vsub.s32 %v676, %v678
      %v680 = vrot.slane %v658, %v679
      %v682 = vunpack.c.l.s4 1966171168
      %v683 = vunpack.c.0.s8 %v682
      %v684 = vlaneseq
      %v685 = vshrl.u32 %v684, 7
      %v686 = vsub.s32 %v683, %v685
      %v687 = vrot.slane %v659, %v686
      %v688 = vcombine.high %v666, %v666
      %v689 = vcombine.high %v673, %v673
      %v690 = vcombine.high %v680, %v680
      %v691 = vcombine.high %v687, %v687
      %v692 = vlaneseq
      %v693 = vshrl.u32 %v692, 7
      %v694 = vsub.s32 0, %v693
      %v695 = vrot.slane %v617, %v694
      %v696 = vlaneseq
      %v697 = vshrl.u32 %v696, 7
      %v698 = vsub.s32 0, %v697
      %v699 = vrot.slane %v631, %v698
      %v700 = vlaneseq
      %v701 = vshrl.u32 %v700, 7
      %v702 = vsub.s32 0, %v701
      %v703 = vrot.slane %v639, %v702
      %v704 = vlaneseq
      %v705 = vshrl.u32 %v704, 7
      %v706 = vsub.s32 0, %v705
      %v707 = vrot.slane %v641, %v706
      %v708 = vlaneseq
      %v709 = vshrl.u32 %v708, 7
      %v710 = vsub.s32 0, %v709
      %v711 = vrot.slane %v624, %v710
      %v712 = vlaneseq
      %v713 = vshrl.u32 %v712, 7
      %v714 = vsub.s32 0, %v713
      %v715 = vrot.slane %v638, %v714
      %v716 = vlaneseq
      %v717 = vshrl.u32 %v716, 7
      %v718 = vsub.s32 0, %v717
      %v719 = vrot.slane %v640, %v718
      %v720 = vlaneseq
      %v721 = vshrl.u32 %v720, 7
      %v722 = vsub.s32 0, %v721
      %v723 = vrot.slane %v642, %v722
      %v724 = vlaneseq
      %v725 = vshrl.u32 %v724, 7
      %v726 = vsub.s32 0, %v725
      %v727 = vrot.slane %v666, %v726
      %v728 = vlaneseq
      %v729 = vshrl.u32 %v728, 7
      %v730 = vsub.s32 0, %v729
      %v731 = vrot.slane %v680, %v730
      %v732 = vlaneseq
      %v733 = vshrl.u32 %v732, 7
      %v734 = vsub.s32 0, %v733
      %v735 = vrot.slane %v688, %v734
      %v736 = vlaneseq
      %v737 = vshrl.u32 %v736, 7
      %v738 = vsub.s32 0, %v737
      %v739 = vrot.slane %v690, %v738
      %v740 = vlaneseq
      %v741 = vshrl.u32 %v740, 7
      %v742 = vsub.s32 0, %v741
      %v743 = vrot.slane %v673, %v742
      %v744 = vlaneseq
      %v745 = vshrl.u32 %v744, 7
      %v746 = vsub.s32 0, %v745
      %v747 = vrot.slane %v687, %v746
      %v748 = vlaneseq
      %v749 = vshrl.u32 %v748, 7
      %v750 = vsub.s32 0, %v749
      %v751 = vrot.slane %v689, %v750
      %v752 = vlaneseq
      %v753 = vshrl.u32 %v752, 7
      %v754 = vsub.s32 0, %v753
      %v755 = vrot.slane %v691, %v754
      %v772 = vadd.f32 %v695, %v584
      %v773 = vadd.f32 %v695, %v589
      %v774 = vadd.f32 %v699, %v584
      %v775 = vadd.f32 %v699, %v589
      %v776 = vadd.f32 %v703, %v584
      %v777 = vadd.f32 %v703, %v589
      %v778 = vadd.f32 %v707, %v584
      %v779 = vadd.f32 %v707, %v589
      %v780 = vadd.f32 %v711, %v584
      %v781 = vadd.f32 %v711, %v589
      %v782 = vadd.f32 %v715, %v584
      %v783 = vadd.f32 %v715, %v589
      %v784 = vadd.f32 %v719, %v584
      %v785 = vadd.f32 %v719, %v589
      %v786 = vadd.f32 %v723, %v584
      %v787 = vadd.f32 %v723, %v589
      %v788 = vadd.f32 %v727, %v584
      %v789 = vadd.f32 %v727, %v589
      %v790 = vadd.f32 %v731, %v584
      %v791 = vadd.f32 %v731, %v589
      %v792 = vadd.f32 %v735, %v584
      %v793 = vadd.f32 %v735, %v589
      %v794 = vadd.f32 %v739, %v584
      %v795 = vadd.f32 %v739, %v589
      %v796 = vadd.f32 %v743, %v584
      %v797 = vadd.f32 %v743, %v589
      %v798 = vadd.f32 %v747, %v584
      %v799 = vadd.f32 %v747, %v589
      %v800 = vadd.f32 %v751, %v584
      %v801 = vadd.f32 %v751, %v589
      %v802 = vadd.f32 %v755, %v584
      %v803 = vadd.f32 %v755, %v589
      %v804 = vlaneseq
      %v805 = vshrl.u32 %v804, 7
      %v806 = vsub.s32 0, %v805
      %v807 = vrot.slane %v413, %v806
      %809 = vbcast.lane.b32.xlu0 %v807, 256
      %v810 = vpop.permute.xlu0 %809
      %s812 = sor.u32 256, 8
      %813 = vbcast.lane.b32.xlu0 %v807, %s812
      %v814 = vpop.permute.xlu0 %813
      %v815 = vlaneseq
      %v816 = vshrl.u32 %v815, 7
      %v817 = vsub.s32 1, %v816
      %v818 = vrot.slane %v413, %v817
      %820 = vbcast.lane.b32.xlu0 %v818, 256
      %v821 = vpop.permute.xlu0 %820
      %s823 = sor.u32 256, 8
      %824 = vbcast.lane.b32.xlu0 %v818, %s823
      %v825 = vpop.permute.xlu0 %824
      %v826 = vlaneseq
      %v827 = vshrl.u32 %v826, 7
      %v828 = vsub.s32 2, %v827
      %v829 = vrot.slane %v413, %v828
      %831 = vbcast.lane.b32.xlu0 %v829, 256
      %v832 = vpop.permute.xlu0 %831
      %s834 = sor.u32 256, 8
      %835 = vbcast.lane.b32.xlu0 %v829, %s834
      %v836 = vpop.permute.xlu0 %835
      %v837 = vlaneseq
      %v838 = vshrl.u32 %v837, 7
      %v839 = vsub.s32 3, %v838
      %v840 = vrot.slane %v413, %v839
      %842 = vbcast.lane.b32.xlu0 %v840, 256
      %v843 = vpop.permute.xlu0 %842
      %s845 = sor.u32 256, 8
      %846 = vbcast.lane.b32.xlu0 %v840, %s845
      %v847 = vpop.permute.xlu0 %846
      %v848 = vlaneseq
      %v849 = vshrl.u32 %v848, 7
      %v850 = vsub.s32 4, %v849
      %v851 = vrot.slane %v413, %v850
      %853 = vbcast.lane.b32.xlu0 %v851, 256
      %v854 = vpop.permute.xlu0 %853
      %s856 = sor.u32 256, 8
      %857 = vbcast.lane.b32.xlu0 %v851, %s856
      %v858 = vpop.permute.xlu0 %857
      %v859 = vlaneseq
      %v860 = vshrl.u32 %v859, 7
      %v861 = vsub.s32 5, %v860
      %v862 = vrot.slane %v413, %v861
      %864 = vbcast.lane.b32.xlu0 %v862, 256
      %v865 = vpop.permute.xlu0 %864
      %s867 = sor.u32 256, 8
      %868 = vbcast.lane.b32.xlu0 %v862, %s867
      %v869 = vpop.permute.xlu0 %868
      %v870 = vlaneseq
      %v871 = vshrl.u32 %v870, 7
      %v872 = vsub.s32 6, %v871
      %v873 = vrot.slane %v413, %v872
      %875 = vbcast.lane.b32.xlu0 %v873, 256
      %v876 = vpop.permute.xlu0 %875
      %s878 = sor.u32 256, 8
      %879 = vbcast.lane.b32.xlu0 %v873, %s878
      %v880 = vpop.permute.xlu0 %879
      %v881 = vlaneseq
      %v882 = vshrl.u32 %v881, 7
      %v883 = vsub.s32 7, %v882
      %v884 = vrot.slane %v413, %v883
      %886 = vbcast.lane.b32.xlu0 %v884, 256
      %v887 = vpop.permute.xlu0 %886
      %s889 = sor.u32 256, 8
      %890 = vbcast.lane.b32.xlu0 %v884, %s889
      %v891 = vpop.permute.xlu0 %890
      %v892 = vlaneseq
      %v893 = vshrl.u32 %v892, 7
      %v894 = vsub.s32 0, %v893
      %v895 = vrot.slane %v414, %v894
      %897 = vbcast.lane.b32.xlu0 %v895, 256
      %v898 = vpop.permute.xlu0 %897
      %s900 = sor.u32 256, 8
      %901 = vbcast.lane.b32.xlu0 %v895, %s900
      %v902 = vpop.permute.xlu0 %901
      %v903 = vlaneseq
      %v904 = vshrl.u32 %v903, 7
      %v905 = vsub.s32 1, %v904
      %v906 = vrot.slane %v414, %v905
      %908 = vbcast.lane.b32.xlu0 %v906, 256
      %v909 = vpop.permute.xlu0 %908
      %s911 = sor.u32 256, 8
      %912 = vbcast.lane.b32.xlu0 %v906, %s911
      %v913 = vpop.permute.xlu0 %912
      %v914 = vlaneseq
      %v915 = vshrl.u32 %v914, 7
      %v916 = vsub.s32 2, %v915
      %v917 = vrot.slane %v414, %v916
      %919 = vbcast.lane.b32.xlu0 %v917, 256
      %v920 = vpop.permute.xlu0 %919
      %s922 = sor.u32 256, 8
      %923 = vbcast.lane.b32.xlu0 %v917, %s922
      %v924 = vpop.permute.xlu0 %923
      %v925 = vlaneseq
      %v926 = vshrl.u32 %v925, 7
      %v927 = vsub.s32 3, %v926
      %v928 = vrot.slane %v414, %v927
      %930 = vbcast.lane.b32.xlu0 %v928, 256
      %v931 = vpop.permute.xlu0 %930
      %s933 = sor.u32 256, 8
      %934 = vbcast.lane.b32.xlu0 %v928, %s933
      %v935 = vpop.permute.xlu0 %934
      %v936 = vlaneseq
      %v937 = vshrl.u32 %v936, 7
      %v938 = vsub.s32 4, %v937
      %v939 = vrot.slane %v414, %v938
      %941 = vbcast.lane.b32.xlu0 %v939, 256
      %v942 = vpop.permute.xlu0 %941
      %s944 = sor.u32 256, 8
      %945 = vbcast.lane.b32.xlu0 %v939, %s944
      %v946 = vpop.permute.xlu0 %945
      %v947 = vlaneseq
      %v948 = vshrl.u32 %v947, 7
      %v949 = vsub.s32 5, %v948
      %v950 = vrot.slane %v414, %v949
      %952 = vbcast.lane.b32.xlu0 %v950, 256
      %v953 = vpop.permute.xlu0 %952
      %s955 = sor.u32 256, 8
      %956 = vbcast.lane.b32.xlu0 %v950, %s955
      %v957 = vpop.permute.xlu0 %956
      %v958 = vlaneseq
      %v959 = vshrl.u32 %v958, 7
      %v960 = vsub.s32 6, %v959
      %v961 = vrot.slane %v414, %v960
      %963 = vbcast.lane.b32.xlu0 %v961, 256
      %v964 = vpop.permute.xlu0 %963
      %s966 = sor.u32 256, 8
      %967 = vbcast.lane.b32.xlu0 %v961, %s966
      %v968 = vpop.permute.xlu0 %967
      %v969 = vlaneseq
      %v970 = vshrl.u32 %v969, 7
      %v971 = vsub.s32 7, %v970
      %v972 = vrot.slane %v414, %v971
      %974 = vbcast.lane.b32.xlu0 %v972, 256
      %v975 = vpop.permute.xlu0 %974
      %s977 = sor.u32 256, 8
      %978 = vbcast.lane.b32.xlu0 %v972, %s977
      %v979 = vpop.permute.xlu0 %978
      %v981 = vlaneseq
      %v982 = vshrl.u32 %v981, 7
      %v983 = vsub.s32 0, %v982
      %v984 = vrot.slane %v250, %v983
      %v986 = vmul.f32 %v810, %v984
      %v987 = vmul.f32 %v814, %v984
      %v988 = vmul.f32 %v821, %v984
      %v989 = vmul.f32 %v825, %v984
      %v990 = vmul.f32 %v832, %v984
      %v991 = vmul.f32 %v836, %v984
      %v992 = vmul.f32 %v843, %v984
      %v993 = vmul.f32 %v847, %v984
      %v994 = vmul.f32 %v854, %v984
      %v995 = vmul.f32 %v858, %v984
      %v996 = vmul.f32 %v865, %v984
      %v997 = vmul.f32 %v869, %v984
      %v998 = vmul.f32 %v876, %v984
      %v999 = vmul.f32 %v880, %v984
      %v1000 = vmul.f32 %v887, %v984
      %v1001 = vmul.f32 %v891, %v984
      %v1002 = vmul.f32 %v898, %v984
      %v1003 = vmul.f32 %v902, %v984
      %v1004 = vmul.f32 %v909, %v984
      %v1005 = vmul.f32 %v913, %v984
      %v1006 = vmul.f32 %v920, %v984
      %v1007 = vmul.f32 %v924, %v984
      %v1008 = vmul.f32 %v931, %v984
      %v1009 = vmul.f32 %v935, %v984
      %v1010 = vmul.f32 %v942, %v984
      %v1011 = vmul.f32 %v946, %v984
      %v1012 = vmul.f32 %v953, %v984
      %v1013 = vmul.f32 %v957, %v984
      %v1014 = vmul.f32 %v964, %v984
      %v1015 = vmul.f32 %v968, %v984
      %v1016 = vmul.f32 %v975, %v984
      %v1017 = vmul.f32 %v979, %v984
      %v1018 = vadd.f32 %v772, %v986
      %v1019 = vadd.f32 %v773, %v987
      %v1020 = vadd.f32 %v774, %v988
      %v1021 = vadd.f32 %v775, %v989
      %v1022 = vadd.f32 %v776, %v990
      %v1023 = vadd.f32 %v777, %v991
      %v1024 = vadd.f32 %v778, %v992
      %v1025 = vadd.f32 %v779, %v993
      %v1026 = vadd.f32 %v780, %v994
      %v1027 = vadd.f32 %v781, %v995
      %v1028 = vadd.f32 %v782, %v996
      %v1029 = vadd.f32 %v783, %v997
      %v1030 = vadd.f32 %v784, %v998
      %v1031 = vadd.f32 %v785, %v999
      %v1032 = vadd.f32 %v786, %v1000
      %v1033 = vadd.f32 %v787, %v1001
      %v1034 = vadd.f32 %v788, %v1002
      %v1035 = vadd.f32 %v789, %v1003
      %v1036 = vadd.f32 %v790, %v1004
      %v1037 = vadd.f32 %v791, %v1005
      %v1038 = vadd.f32 %v792, %v1006
      %v1039 = vadd.f32 %v793, %v1007
      %v1040 = vadd.f32 %v794, %v1008
      %v1041 = vadd.f32 %v795, %v1009
      %v1042 = vadd.f32 %v796, %v1010
      %v1043 = vadd.f32 %v797, %v1011
      %v1044 = vadd.f32 %v798, %v1012
      %v1045 = vadd.f32 %v799, %v1013
      %v1046 = vadd.f32 %v800, %v1014
      %v1047 = vadd.f32 %v801, %v1015
      %v1048 = vadd.f32 %v802, %v1016
      %v1049 = vadd.f32 %v803, %v1017
      %v1051 = vlaneseq
      %v1052 = vshrl.u32 %v1051, 7
      %v1053 = vsub.s32 0, %v1052
      %v1054 = vrot.slane %v251, %v1053
      %v1056 = vadd.f32 %v1018, %v1054
      %v1057 = vadd.f32 %v1019, %v1054
      %v1058 = vadd.f32 %v1020, %v1054
      %v1059 = vadd.f32 %v1021, %v1054
      %v1060 = vadd.f32 %v1022, %v1054
      %v1061 = vadd.f32 %v1023, %v1054
      %v1062 = vadd.f32 %v1024, %v1054
      %v1063 = vadd.f32 %v1025, %v1054
      %v1064 = vadd.f32 %v1026, %v1054
      %v1065 = vadd.f32 %v1027, %v1054
      %v1066 = vadd.f32 %v1028, %v1054
      %v1067 = vadd.f32 %v1029, %v1054
      %v1068 = vadd.f32 %v1030, %v1054
      %v1069 = vadd.f32 %v1031, %v1054
      %v1070 = vadd.f32 %v1032, %v1054
      %v1071 = vadd.f32 %v1033, %v1054
      %v1072 = vadd.f32 %v1034, %v1054
      %v1073 = vadd.f32 %v1035, %v1054
      %v1074 = vadd.f32 %v1036, %v1054
      %v1075 = vadd.f32 %v1037, %v1054
      %v1076 = vadd.f32 %v1038, %v1054
      %v1077 = vadd.f32 %v1039, %v1054
      %v1078 = vadd.f32 %v1040, %v1054
      %v1079 = vadd.f32 %v1041, %v1054
      %v1080 = vadd.f32 %v1042, %v1054
      %v1081 = vadd.f32 %v1043, %v1054
      %v1082 = vadd.f32 %v1044, %v1054
      %v1083 = vadd.f32 %v1045, %v1054
      %v1084 = vadd.f32 %v1046, %v1054
      %v1085 = vadd.f32 %v1047, %v1054
      %v1086 = vadd.f32 %v1048, %v1054
      %v1087 = vadd.f32 %v1049, %v1054
      %v1088 = vtanh.pop %v1056
      %v1089 = vtanh.pop %v1057
      %v1090 = vtanh.pop %v1058
      %v1091 = vtanh.pop %v1059
      %v1092 = vtanh.pop %v1060
      %v1093 = vtanh.pop %v1061
      %v1094 = vtanh.pop %v1062
      %v1095 = vtanh.pop %v1063
      %v1096 = vtanh.pop %v1064
      %v1097 = vtanh.pop %v1065
      %v1098 = vtanh.pop %v1066
      %v1099 = vtanh.pop %v1067
      %v1100 = vtanh.pop %v1068
      %v1101 = vtanh.pop %v1069
      %v1102 = vtanh.pop %v1070
      %v1103 = vtanh.pop %v1071
      %v1104 = vtanh.pop %v1072
      %v1105 = vtanh.pop %v1073
      %v1106 = vtanh.pop %v1074
      %v1107 = vtanh.pop %v1075
      %v1108 = vtanh.pop %v1076
      %v1109 = vtanh.pop %v1077
      %v1110 = vtanh.pop %v1078
      %v1111 = vtanh.pop %v1079
      %v1112 = vtanh.pop %v1080
      %v1113 = vtanh.pop %v1081
      %v1114 = vtanh.pop %v1082
      %v1115 = vtanh.pop %v1083
      %v1116 = vtanh.pop %v1084
      %v1117 = vtanh.pop %v1085
      %v1118 = vtanh.pop %v1086
      %v1119 = vtanh.pop %v1087
      %v1121 = vlaneseq
      %v1122 = vshrl.u32 %v1121, 7
      %v1123 = vsub.s32 0, %v1122
      %v1124 = vrot.slane %v254, %v1123
      %v1127 = vsel %vm59, %v1088, 0
      %v1130 = vsel %vm59, %v1089, 0
      %v1133 = vsel %vm59, %v1090, 0
      %v1136 = vsel %vm59, %v1091, 0
      %v1139 = vsel %vm59, %v1092, 0
      %v1142 = vsel %vm59, %v1093, 0
      %v1145 = vsel %vm59, %v1094, 0
      %v1148 = vsel %vm59, %v1095, 0
      %v1151 = vsel %vm59, %v1096, 0
      %v1154 = vsel %vm59, %v1097, 0
      %v1157 = vsel %vm59, %v1098, 0
      %v1160 = vsel %vm59, %v1099, 0
      %v1163 = vsel %vm59, %v1100, 0
      %v1166 = vsel %vm59, %v1101, 0
      %v1169 = vsel %vm59, %v1102, 0
      %v1172 = vsel %vm59, %v1103, 0
      %v1175 = vsel %vm59, %v1104, 0
      %v1178 = vsel %vm59, %v1105, 0
      %v1181 = vsel %vm59, %v1106, 0
      %v1184 = vsel %vm59, %v1107, 0
      %v1187 = vsel %vm59, %v1108, 0
      %v1190 = vsel %vm59, %v1109, 0
      %v1193 = vsel %vm59, %v1110, 0
      %v1196 = vsel %vm59, %v1111, 0
      %v1199 = vsel %vm59, %v1112, 0
      %v1202 = vsel %vm59, %v1113, 0
      %v1205 = vsel %vm59, %v1114, 0
      %v1208 = vsel %vm59, %v1115, 0
      %v1211 = vsel %vm59, %v1116, 0
      %v1214 = vsel %vm59, %v1117, 0
      %v1217 = vsel %vm59, %v1118, 0
      %v1220 = vsel %vm59, %v1119, 0
      %1222 = vmatprep.subr.mxu0 0.0
      %1223 = vmatpush1.msra.mxu0 %v252
      %1224 = vmatprep.subr.mxu0 0.0
      %1225 = vmatpush1.msra.mxu0 %v253
      %1226 = vmatprep.subr.mxu0 0.0
      %1227 = vmatpush1.msra.mxu0 0.0
      %1228 = vmatprep.subr.mxu0 0.0
      %1229 = vmatpush1.msra.mxu0 0.0
      %1230 = vmatprep.subr.mxu0 0.0
      %1231 = vmatpush1.msra.mxu0 0.0
      %1232 = vmatprep.subr.mxu0 0.0
      %1233 = vmatpush1.msra.mxu0 0.0
      %1234 = vmatprep.subr.mxu0 0.0
      %1235 = vmatpush1.msra.mxu0 0.0
      %1236 = vmatprep.subr.mxu0 0.0
      %1237 = vmatpush1.msra.mxu0 0.0
      %1238 = vmatprep.subr.mxu0 0.0
      %1239 = vmatpush1.msra.mxu0 0.0
      %1240 = vmatprep.subr.mxu0 0.0
      %1241 = vmatpush1.msra.mxu0 0.0
      %1242 = vmatprep.subr.mxu0 0.0
      %1243 = vmatpush1.msra.mxu0 0.0
      %1244 = vmatprep.subr.mxu0 0.0
      %1245 = vmatpush1.msra.mxu0 0.0
      %1246 = vmatprep.subr.mxu0 0.0
      %1247 = vmatpush1.msra.mxu0 0.0
      %1248 = vmatprep.subr.mxu0 0.0
      %1249 = vmatpush1.msra.mxu0 0.0
      %1250 = vmatprep.subr.mxu0 0.0
      %1251 = vmatpush1.msra.mxu0 0.0
      %1252 = vmatprep.subr.mxu0 0.0
      %1253 = vmatpush1.msra.mxu0 0.0
      %1254 = vmatprep.subr.mxu0 0.0
      %1255 = vmatpush1.msra.mxu0 0.0
      %1256 = vmatprep.subr.mxu0 0.0
      %1257 = vmatpush1.msra.mxu0 0.0
      %1258 = vmatprep.subr.mxu0 0.0
      %1259 = vmatpush1.msra.mxu0 0.0
      %1260 = vmatprep.subr.mxu0 0.0
      %1261 = vmatpush1.msra.mxu0 0.0
      %1262 = vmatprep.subr.mxu0 0.0
      %1263 = vmatpush1.msra.mxu0 0.0
      %1264 = vmatprep.subr.mxu0 0.0
      %1265 = vmatpush1.msra.mxu0 0.0
      %1266 = vmatprep.subr.mxu0 0.0
      %1267 = vmatpush1.msra.mxu0 0.0
      %1268 = vmatprep.subr.mxu0 0.0
      %1269 = vmatpush1.msra.mxu0 0.0
      %1270 = vmatprep.subr.mxu0 0.0
      %1271 = vmatpush1.msra.mxu0 0.0
      %1272 = vmatprep.subr.mxu0 0.0
      %1273 = vmatpush1.msra.mxu0 0.0
      %1274 = vmatprep.subr.mxu0 0.0
      %1275 = vmatpush1.msra.mxu0 0.0
      %1276 = vmatprep.subr.mxu0 0.0
      %1277 = vmatpush1.msra.mxu0 0.0
      %1278 = vmatprep.subr.mxu0 0.0
      %1279 = vmatpush1.msra.mxu0 0.0
      %1280 = vmatprep.subr.mxu0 0.0
      %1281 = vmatpush1.msra.mxu0 0.0
      %1282 = vmatprep.subr.mxu0 0.0
      %1283 = vmatpush1.msra.mxu0 0.0
      %1284 = vmatprep.subr.mxu0 0.0
      %1285 = vmatpush1.msra.mxu0 0.0
      %1286 = vmatprep.mubr.f32.mxu0 0.0
      %1287 = vmatmul.mubr.f32.gmra.mrb[0].mxu0 %v1127
      %v1288 = vpop.f32.mrb[0].mxu0
      %v1289 = vadd.f32 %v1124, %v1288
      %v1290 = vpop.f32.mrb[0].mxu0
      %1291 = vmatprep.mubr.f32.mxu0 0.0
      %1292 = vmatmul.mubr.f32.gmra.mrb[0].mxu0 %v1130
      %v1293 = vpop.f32.mrb[0].mxu0
      %v1294 = vadd.f32 %v1124, %v1293
      %v1295 = vpop.f32.mrb[0].mxu0
      %1296 = vmatprep.mubr.f32.mxu0 0.0
      %1297 = vmatmul.mubr.f32.gmra.mrb[0].mxu0 %v1133
      %v1298 = vpop.f32.mrb[0].mxu0
      %v1299 = vadd.f32 %v1124, %v1298
      %v1300 = vpop.f32.mrb[0].mxu0
      %1301 = vmatprep.mubr.f32.mxu0 0.0
      %1302 = vmatmul.mubr.f32.gmra.mrb[0].mxu0 %v1136
      %v1303 = vpop.f32.mrb[0].mxu0
      %v1304 = vadd.f32 %v1124, %v1303
      %v1305 = vpop.f32.mrb[0].mxu0
      %1306 = vmatprep.mubr.f32.mxu0 0.0
      %1307 = vmatmul.mubr.f32.gmra.mrb[0].mxu0 %v1139
      %v1308 = vpop.f32.mrb[0].mxu0
      %v1309 = vadd.f32 %v1124, %v1308
      %v1310 = vpop.f32.mrb[0].mxu0
      %1311 = vmatprep.mubr.f32.mxu0 0.0
      %1312 = vmatmul.mubr.f32.gmra.mrb[0].mxu0 %v1142
      %v1313 = vpop.f32.mrb[0].mxu0
      %v1314 = vadd.f32 %v1124, %v1313
      %v1315 = vpop.f32.mrb[0].mxu0
      %1316 = vmatprep.mubr.f32.mxu0 0.0
      %1317 = vmatmul.mubr.f32.gmra.mrb[0].mxu0 %v1145
      %v1318 = vpop.f32.mrb[0].mxu0
      %v1319 = vadd.f32 %v1124, %v1318
      %v1320 = vpop.f32.mrb[0].mxu0
      %1321 = vmatprep.mubr.f32.mxu0 0.0
      %1322 = vmatmul.mubr.f32.gmra.mrb[0].mxu0 %v1148
      %v1323 = vpop.f32.mrb[0].mxu0
      %v1324 = vadd.f32 %v1124, %v1323
      %v1325 = vpop.f32.mrb[0].mxu0
      %1326 = vmatprep.mubr.f32.mxu0 0.0
      %1327 = vmatmul.mubr.f32.gmra.mrb[0].mxu0 %v1151
      %v1328 = vpop.f32.mrb[0].mxu0
      %v1329 = vadd.f32 %v1124, %v1328
      %v1330 = vpop.f32.mrb[0].mxu0
      %1331 = vmatprep.mubr.f32.mxu0 0.0
      %1332 = vmatmul.mubr.f32.gmra.mrb[0].mxu0 %v1154
      %v1333 = vpop.f32.mrb[0].mxu0
      %v1334 = vadd.f32 %v1124, %v1333
      %v1335 = vpop.f32.mrb[0].mxu0
      %1336 = vmatprep.mubr.f32.mxu0 0.0
      %1337 = vmatmul.mubr.f32.gmra.mrb[0].mxu0 %v1157
      %v1338 = vpop.f32.mrb[0].mxu0
      %v1339 = vadd.f32 %v1124, %v1338
      %v1340 = vpop.f32.mrb[0].mxu0
      %1341 = vmatprep.mubr.f32.mxu0 0.0
      %1342 = vmatmul.mubr.f32.gmra.mrb[0].mxu0 %v1160
      %v1343 = vpop.f32.mrb[0].mxu0
      %v1344 = vadd.f32 %v1124, %v1343
      %v1345 = vpop.f32.mrb[0].mxu0
      %1346 = vmatprep.mubr.f32.mxu0 0.0
      %1347 = vmatmul.mubr.f32.gmra.mrb[0].mxu0 %v1163
      %v1348 = vpop.f32.mrb[0].mxu0
      %v1349 = vadd.f32 %v1124, %v1348
      %v1350 = vpop.f32.mrb[0].mxu0
      %1351 = vmatprep.mubr.f32.mxu0 0.0
      %1352 = vmatmul.mubr.f32.gmra.mrb[0].mxu0 %v1166
      %v1353 = vpop.f32.mrb[0].mxu0
      %v1354 = vadd.f32 %v1124, %v1353
      %v1355 = vpop.f32.mrb[0].mxu0
      %1356 = vmatprep.mubr.f32.mxu0 0.0
      %1357 = vmatmul.mubr.f32.gmra.mrb[0].mxu0 %v1169
      %v1358 = vpop.f32.mrb[0].mxu0
      %v1359 = vadd.f32 %v1124, %v1358
      %v1360 = vpop.f32.mrb[0].mxu0
      %1361 = vmatprep.mubr.f32.mxu0 0.0
      %1362 = vmatmul.mubr.f32.gmra.mrb[0].mxu0 %v1172
      %v1363 = vpop.f32.mrb[0].mxu0
      %v1364 = vadd.f32 %v1124, %v1363
      %v1365 = vpop.f32.mrb[0].mxu0
      %1366 = vmatprep.mubr.f32.mxu0 0.0
      %1367 = vmatmul.mubr.f32.gmra.mrb[0].mxu0 %v1175
      %v1368 = vpop.f32.mrb[0].mxu0
      %v1369 = vadd.f32 %v1124, %v1368
      %v1370 = vpop.f32.mrb[0].mxu0
      %1371 = vmatprep.mubr.f32.mxu0 0.0
      %1372 = vmatmul.mubr.f32.gmra.mrb[0].mxu0 %v1178
      %v1373 = vpop.f32.mrb[0].mxu0
      %v1374 = vadd.f32 %v1124, %v1373
      %v1375 = vpop.f32.mrb[0].mxu0
      %1376 = vmatprep.mubr.f32.mxu0 0.0
      %1377 = vmatmul.mubr.f32.gmra.mrb[0].mxu0 %v1181
      %v1378 = vpop.f32.mrb[0].mxu0
      %v1379 = vadd.f32 %v1124, %v1378
      %v1380 = vpop.f32.mrb[0].mxu0
      %1381 = vmatprep.mubr.f32.mxu0 0.0
      %1382 = vmatmul.mubr.f32.gmra.mrb[0].mxu0 %v1184
      %v1383 = vpop.f32.mrb[0].mxu0
      %v1384 = vadd.f32 %v1124, %v1383
      %v1385 = vpop.f32.mrb[0].mxu0
      %1386 = vmatprep.mubr.f32.mxu0 0.0
      %1387 = vmatmul.mubr.f32.gmra.mrb[0].mxu0 %v1187
      %v1388 = vpop.f32.mrb[0].mxu0
      %v1389 = vadd.f32 %v1124, %v1388
      %v1390 = vpop.f32.mrb[0].mxu0
      %1391 = vmatprep.mubr.f32.mxu0 0.0
      %1392 = vmatmul.mubr.f32.gmra.mrb[0].mxu0 %v1190
      %v1393 = vpop.f32.mrb[0].mxu0
      %v1394 = vadd.f32 %v1124, %v1393
      %v1395 = vpop.f32.mrb[0].mxu0
      %1396 = vmatprep.mubr.f32.mxu0 0.0
      %1397 = vmatmul.mubr.f32.gmra.mrb[0].mxu0 %v1193
      %v1398 = vpop.f32.mrb[0].mxu0
      %v1399 = vadd.f32 %v1124, %v1398
      %v1400 = vpop.f32.mrb[0].mxu0
      %1401 = vmatprep.mubr.f32.mxu0 0.0
      %1402 = vmatmul.mubr.f32.gmra.mrb[0].mxu0 %v1196
      %v1403 = vpop.f32.mrb[0].mxu0
      %v1404 = vadd.f32 %v1124, %v1403
      %v1405 = vpop.f32.mrb[0].mxu0
      %1406 = vmatprep.mubr.f32.mxu0 0.0
      %1407 = vmatmul.mubr.f32.gmra.mrb[0].mxu0 %v1199
      %v1408 = vpop.f32.mrb[0].mxu0
      %v1409 = vadd.f32 %v1124, %v1408
      %v1410 = vpop.f32.mrb[0].mxu0
      %1411 = vmatprep.mubr.f32.mxu0 0.0
      %1412 = vmatmul.mubr.f32.gmra.mrb[0].mxu0 %v1202
      %v1413 = vpop.f32.mrb[0].mxu0
      %v1414 = vadd.f32 %v1124, %v1413
      %v1415 = vpop.f32.mrb[0].mxu0
      %1416 = vmatprep.mubr.f32.mxu0 0.0
      %1417 = vmatmul.mubr.f32.gmra.mrb[0].mxu0 %v1205
      %v1418 = vpop.f32.mrb[0].mxu0
      %v1419 = vadd.f32 %v1124, %v1418
      %v1420 = vpop.f32.mrb[0].mxu0
      %1421 = vmatprep.mubr.f32.mxu0 0.0
      %1422 = vmatmul.mubr.f32.gmra.mrb[0].mxu0 %v1208
      %v1423 = vpop.f32.mrb[0].mxu0
      %v1424 = vadd.f32 %v1124, %v1423
      %v1425 = vpop.f32.mrb[0].mxu0
      %1426 = vmatprep.mubr.f32.mxu0 0.0
      %1427 = vmatmul.mubr.f32.gmra.mrb[0].mxu0 %v1211
      %v1428 = vpop.f32.mrb[0].mxu0
      %v1429 = vadd.f32 %v1124, %v1428
      %v1430 = vpop.f32.mrb[0].mxu0
      %1431 = vmatprep.mubr.f32.mxu0 0.0
      %1432 = vmatmul.mubr.f32.gmra.mrb[0].mxu0 %v1214
      %v1433 = vpop.f32.mrb[0].mxu0
      %v1434 = vadd.f32 %v1124, %v1433
      %v1435 = vpop.f32.mrb[0].mxu0
      %1436 = vmatprep.mubr.f32.mxu0 0.0
      %1437 = vmatmul.mubr.f32.gmra.mrb[0].mxu0 %v1217
      %v1438 = vpop.f32.mrb[0].mxu0
      %v1439 = vadd.f32 %v1124, %v1438
      %v1440 = vpop.f32.mrb[0].mxu0
      %1441 = vmatprep.mubr.f32.mxu0 0.0
      %1442 = vmatmul.mubr.f32.gmra.mrb[0].mxu0 %v1220
      %v1443 = vpop.f32.mrb[0].mxu0
      %v1444 = vadd.f32 %v1124, %v1443
      %v1445 = vpop.f32.mrb[0].mxu0
      %1446 = vdwg.mxu0
      %v1447 = vtanh.pop %v1289
      %v1448 = vtanh.pop %v1294
      %v1449 = vtanh.pop %v1299
      %v1450 = vtanh.pop %v1304
      %v1451 = vtanh.pop %v1309
      %v1452 = vtanh.pop %v1314
      %v1453 = vtanh.pop %v1319
      %v1454 = vtanh.pop %v1324
      %v1455 = vtanh.pop %v1329
      %v1456 = vtanh.pop %v1334
      %v1457 = vtanh.pop %v1339
      %v1458 = vtanh.pop %v1344
      %v1459 = vtanh.pop %v1349
      %v1460 = vtanh.pop %v1354
      %v1461 = vtanh.pop %v1359
      %v1462 = vtanh.pop %v1364
      %v1463 = vtanh.pop %v1369
      %v1464 = vtanh.pop %v1374
      %v1465 = vtanh.pop %v1379
      %v1466 = vtanh.pop %v1384
      %v1467 = vtanh.pop %v1389
      %v1468 = vtanh.pop %v1394
      %v1469 = vtanh.pop %v1399
      %v1470 = vtanh.pop %v1404
      %v1471 = vtanh.pop %v1409
      %v1472 = vtanh.pop %v1414
      %v1473 = vtanh.pop %v1419
      %v1474 = vtanh.pop %v1424
      %v1475 = vtanh.pop %v1429
      %v1476 = vtanh.pop %v1434
      %v1477 = vtanh.pop %v1439
      %v1478 = vtanh.pop %v1444
      %v1480 = vlaneseq
      %v1481 = vshrl.u32 %v1480, 7
      %v1482 = vsub.s32 0, %v1481
      %v1483 = vrot.slane %v257, %v1482
      %v1486 = vsel %vm59, %v1447, 0
      %v1489 = vsel %vm59, %v1448, 0
      %v1492 = vsel %vm59, %v1449, 0
      %v1495 = vsel %vm59, %v1450, 0
      %v1498 = vsel %vm59, %v1451, 0
      %v1501 = vsel %vm59, %v1452, 0
      %v1504 = vsel %vm59, %v1453, 0
      %v1507 = vsel %vm59, %v1454, 0
      %v1510 = vsel %vm59, %v1455, 0
      %v1513 = vsel %vm59, %v1456, 0
      %v1516 = vsel %vm59, %v1457, 0
      %v1519 = vsel %vm59, %v1458, 0
      %v1522 = vsel %vm59, %v1459, 0
      %v1525 = vsel %vm59, %v1460, 0
      %v1528 = vsel %vm59, %v1461, 0
      %v1531 = vsel %vm59, %v1462, 0
      %v1534 = vsel %vm59, %v1463, 0
      %v1537 = vsel %vm59, %v1464, 0
      %v1540 = vsel %vm59, %v1465, 0
      %v1543 = vsel %vm59, %v1466, 0
      %v1546 = vsel %vm59, %v1467, 0
      %v1549 = vsel %vm59, %v1468, 0
      %v1552 = vsel %vm59, %v1469, 0
      %v1555 = vsel %vm59, %v1470, 0
      %v1558 = vsel %vm59, %v1471, 0
      %v1561 = vsel %vm59, %v1472, 0
      %v1564 = vsel %vm59, %v1473, 0
      %v1567 = vsel %vm59, %v1474, 0
      %v1570 = vsel %vm59, %v1475, 0
      %v1573 = vsel %vm59, %v1476, 0
      %v1576 = vsel %vm59, %v1477, 0
      %v1579 = vsel %vm59, %v1478, 0
      %1581 = vmatprep.subr.mxu0 0.0
      %1582 = vmatpush1.msra.mxu0 %v255
      %1583 = vmatprep.subr.mxu0 0.0
      %1584 = vmatpush1.msra.mxu0 %v256
      %1585 = vmatprep.subr.mxu0 0.0
      %1586 = vmatpush1.msra.mxu0 0.0
      %1587 = vmatprep.subr.mxu0 0.0
      %1588 = vmatpush1.msra.mxu0 0.0
      %1589 = vmatprep.subr.mxu0 0.0
      %1590 = vmatpush1.msra.mxu0 0.0
      %1591 = vmatprep.subr.mxu0 0.0
      %1592 = vmatpush1.msra.mxu0 0.0
      %1593 = vmatprep.subr.mxu0 0.0
      %1594 = vmatpush1.msra.mxu0 0.0
      %1595 = vmatprep.subr.mxu0 0.0
      %1596 = vmatpush1.msra.mxu0 0.0
      %1597 = vmatprep.subr.mxu0 0.0
      %1598 = vmatpush1.msra.mxu0 0.0
      %1599 = vmatprep.subr.mxu0 0.0
      %1600 = vmatpush1.msra.mxu0 0.0
      %1601 = vmatprep.subr.mxu0 0.0
      %1602 = vmatpush1.msra.mxu0 0.0
      %1603 = vmatprep.subr.mxu0 0.0
      %1604 = vmatpush1.msra.mxu0 0.0
      %1605 = vmatprep.subr.mxu0 0.0
      %1606 = vmatpush1.msra.mxu0 0.0
      %1607 = vmatprep.subr.mxu0 0.0
      %1608 = vmatpush1.msra.mxu0 0.0
      %1609 = vmatprep.subr.mxu0 0.0
      %1610 = vmatpush1.msra.mxu0 0.0
      %1611 = vmatprep.subr.mxu0 0.0
      %1612 = vmatpush1.msra.mxu0 0.0
      %1613 = vmatprep.subr.mxu0 0.0
      %1614 = vmatpush1.msra.mxu0 0.0
      %1615 = vmatprep.subr.mxu0 0.0
      %1616 = vmatpush1.msra.mxu0 0.0
      %1617 = vmatprep.subr.mxu0 0.0
      %1618 = vmatpush1.msra.mxu0 0.0
      %1619 = vmatprep.subr.mxu0 0.0
      %1620 = vmatpush1.msra.mxu0 0.0
      %1621 = vmatprep.subr.mxu0 0.0
      %1622 = vmatpush1.msra.mxu0 0.0
      %1623 = vmatprep.subr.mxu0 0.0
      %1624 = vmatpush1.msra.mxu0 0.0
      %1625 = vmatprep.subr.mxu0 0.0
      %1626 = vmatpush1.msra.mxu0 0.0
      %1627 = vmatprep.subr.mxu0 0.0
      %1628 = vmatpush1.msra.mxu0 0.0
      %1629 = vmatprep.subr.mxu0 0.0
      %1630 = vmatpush1.msra.mxu0 0.0
      %1631 = vmatprep.subr.mxu0 0.0
      %1632 = vmatpush1.msra.mxu0 0.0
      %1633 = vmatprep.subr.mxu0 0.0
      %1634 = vmatpush1.msra.mxu0 0.0
      %1635 = vmatprep.subr.mxu0 0.0
      %1636 = vmatpush1.msra.mxu0 0.0
      %1637 = vmatprep.subr.mxu0 0.0
      %1638 = vmatpush1.msra.mxu0 0.0
      %1639 = vmatprep.subr.mxu0 0.0
      %1640 = vmatpush1.msra.mxu0 0.0
      %1641 = vmatprep.subr.mxu0 0.0
      %1642 = vmatpush1.msra.mxu0 0.0
      %1643 = vmatprep.subr.mxu0 0.0
      %1644 = vmatpush1.msra.mxu0 0.0
      %1645 = vmatprep.mubr.f32.mxu0 0.0
      %1646 = vmatmul.mubr.f32.gmra.mrb[0].mxu0 %v1486
      %v1647 = vpop.f32.mrb[0].mxu0
      %v1648 = vadd.f32 %v1483, %v1647
      %v1649 = vpop.f32.mrb[0].mxu0
      %1650 = vmatprep.mubr.f32.mxu0 0.0
      %1651 = vmatmul.mubr.f32.gmra.mrb[0].mxu0 %v1489
      %v1652 = vpop.f32.mrb[0].mxu0
      %v1653 = vadd.f32 %v1483, %v1652
      %v1654 = vpop.f32.mrb[0].mxu0
      %1655 = vmatprep.mubr.f32.mxu0 0.0
      %1656 = vmatmul.mubr.f32.gmra.mrb[0].mxu0 %v1492
      %v1657 = vpop.f32.mrb[0].mxu0
      %v1658 = vadd.f32 %v1483, %v1657
      %v1659 = vpop.f32.mrb[0].mxu0
      %1660 = vmatprep.mubr.f32.mxu0 0.0
      %1661 = vmatmul.mubr.f32.gmra.mrb[0].mxu0 %v1495
      %v1662 = vpop.f32.mrb[0].mxu0
      %v1663 = vadd.f32 %v1483, %v1662
      %v1664 = vpop.f32.mrb[0].mxu0
      %1665 = vmatprep.mubr.f32.mxu0 0.0
      %1666 = vmatmul.mubr.f32.gmra.mrb[0].mxu0 %v1498
      %v1667 = vpop.f32.mrb[0].mxu0
      %v1668 = vadd.f32 %v1483, %v1667
      %v1669 = vpop.f32.mrb[0].mxu0
      %1670 = vmatprep.mubr.f32.mxu0 0.0
      %1671 = vmatmul.mubr.f32.gmra.mrb[0].mxu0 %v1501
      %v1672 = vpop.f32.mrb[0].mxu0
      %v1673 = vadd.f32 %v1483, %v1672
      %v1674 = vpop.f32.mrb[0].mxu0
      %1675 = vmatprep.mubr.f32.mxu0 0.0
      %1676 = vmatmul.mubr.f32.gmra.mrb[0].mxu0 %v1504
      %v1677 = vpop.f32.mrb[0].mxu0
      %v1678 = vadd.f32 %v1483, %v1677
      %v1679 = vpop.f32.mrb[0].mxu0
      %1680 = vmatprep.mubr.f32.mxu0 0.0
      %1681 = vmatmul.mubr.f32.gmra.mrb[0].mxu0 %v1507
      %v1682 = vpop.f32.mrb[0].mxu0
      %v1683 = vadd.f32 %v1483, %v1682
      %v1684 = vpop.f32.mrb[0].mxu0
      %1685 = vmatprep.mubr.f32.mxu0 0.0
      %1686 = vmatmul.mubr.f32.gmra.mrb[0].mxu0 %v1510
      %v1687 = vpop.f32.mrb[0].mxu0
      %v1688 = vadd.f32 %v1483, %v1687
      %v1689 = vpop.f32.mrb[0].mxu0
      %1690 = vmatprep.mubr.f32.mxu0 0.0
      %1691 = vmatmul.mubr.f32.gmra.mrb[0].mxu0 %v1513
      %v1692 = vpop.f32.mrb[0].mxu0
      %v1693 = vadd.f32 %v1483, %v1692
      %v1694 = vpop.f32.mrb[0].mxu0
      %1695 = vmatprep.mubr.f32.mxu0 0.0
      %1696 = vmatmul.mubr.f32.gmra.mrb[0].mxu0 %v1516
      %v1697 = vpop.f32.mrb[0].mxu0
      %v1698 = vadd.f32 %v1483, %v1697
      %v1699 = vpop.f32.mrb[0].mxu0
      %1700 = vmatprep.mubr.f32.mxu0 0.0
      %1701 = vmatmul.mubr.f32.gmra.mrb[0].mxu0 %v1519
      %v1702 = vpop.f32.mrb[0].mxu0
      %v1703 = vadd.f32 %v1483, %v1702
      %v1704 = vpop.f32.mrb[0].mxu0
      %1705 = vmatprep.mubr.f32.mxu0 0.0
      %1706 = vmatmul.mubr.f32.gmra.mrb[0].mxu0 %v1522
      %v1707 = vpop.f32.mrb[0].mxu0
      %v1708 = vadd.f32 %v1483, %v1707
      %v1709 = vpop.f32.mrb[0].mxu0
      %1710 = vmatprep.mubr.f32.mxu0 0.0
      %1711 = vmatmul.mubr.f32.gmra.mrb[0].mxu0 %v1525
      %v1712 = vpop.f32.mrb[0].mxu0
      %v1713 = vadd.f32 %v1483, %v1712
      %v1714 = vpop.f32.mrb[0].mxu0
      %1715 = vmatprep.mubr.f32.mxu0 0.0
      %1716 = vmatmul.mubr.f32.gmra.mrb[0].mxu0 %v1528
      %v1717 = vpop.f32.mrb[0].mxu0
      %v1718 = vadd.f32 %v1483, %v1717
      %v1719 = vpop.f32.mrb[0].mxu0
      %1720 = vmatprep.mubr.f32.mxu0 0.0
      %1721 = vmatmul.mubr.f32.gmra.mrb[0].mxu0 %v1531
      %v1722 = vpop.f32.mrb[0].mxu0
      %v1723 = vadd.f32 %v1483, %v1722
      %v1724 = vpop.f32.mrb[0].mxu0
      %1725 = vmatprep.mubr.f32.mxu0 0.0
      %1726 = vmatmul.mubr.f32.gmra.mrb[0].mxu0 %v1534
      %v1727 = vpop.f32.mrb[0].mxu0
      %v1728 = vadd.f32 %v1483, %v1727
      %v1729 = vpop.f32.mrb[0].mxu0
      %1730 = vmatprep.mubr.f32.mxu0 0.0
      %1731 = vmatmul.mubr.f32.gmra.mrb[0].mxu0 %v1537
      %v1732 = vpop.f32.mrb[0].mxu0
      %v1733 = vadd.f32 %v1483, %v1732
      %v1734 = vpop.f32.mrb[0].mxu0
      %1735 = vmatprep.mubr.f32.mxu0 0.0
      %1736 = vmatmul.mubr.f32.gmra.mrb[0].mxu0 %v1540
      %v1737 = vpop.f32.mrb[0].mxu0
      %v1738 = vadd.f32 %v1483, %v1737
      %v1739 = vpop.f32.mrb[0].mxu0
      %1740 = vmatprep.mubr.f32.mxu0 0.0
      %1741 = vmatmul.mubr.f32.gmra.mrb[0].mxu0 %v1543
      %v1742 = vpop.f32.mrb[0].mxu0
      %v1743 = vadd.f32 %v1483, %v1742
      %v1744 = vpop.f32.mrb[0].mxu0
      %1745 = vmatprep.mubr.f32.mxu0 0.0
      %1746 = vmatmul.mubr.f32.gmra.mrb[0].mxu0 %v1546
      %v1747 = vpop.f32.mrb[0].mxu0
      %v1748 = vadd.f32 %v1483, %v1747
      %v1749 = vpop.f32.mrb[0].mxu0
      %1750 = vmatprep.mubr.f32.mxu0 0.0
      %1751 = vmatmul.mubr.f32.gmra.mrb[0].mxu0 %v1549
      %v1752 = vpop.f32.mrb[0].mxu0
      %v1753 = vadd.f32 %v1483, %v1752
      %v1754 = vpop.f32.mrb[0].mxu0
      %1755 = vmatprep.mubr.f32.mxu0 0.0
      %1756 = vmatmul.mubr.f32.gmra.mrb[0].mxu0 %v1552
      %v1757 = vpop.f32.mrb[0].mxu0
      %v1758 = vadd.f32 %v1483, %v1757
      %v1759 = vpop.f32.mrb[0].mxu0
      %1760 = vmatprep.mubr.f32.mxu0 0.0
      %1761 = vmatmul.mubr.f32.gmra.mrb[0].mxu0 %v1555
      %v1762 = vpop.f32.mrb[0].mxu0
      %v1763 = vadd.f32 %v1483, %v1762
      %v1764 = vpop.f32.mrb[0].mxu0
      %1765 = vmatprep.mubr.f32.mxu0 0.0
      %1766 = vmatmul.mubr.f32.gmra.mrb[0].mxu0 %v1558
      %v1767 = vpop.f32.mrb[0].mxu0
      %v1768 = vadd.f32 %v1483, %v1767
      %v1769 = vpop.f32.mrb[0].mxu0
      %1770 = vmatprep.mubr.f32.mxu0 0.0
      %1771 = vmatmul.mubr.f32.gmra.mrb[0].mxu0 %v1561
      %v1772 = vpop.f32.mrb[0].mxu0
      %v1773 = vadd.f32 %v1483, %v1772
      %v1774 = vpop.f32.mrb[0].mxu0
      %1775 = vmatprep.mubr.f32.mxu0 0.0
      %1776 = vmatmul.mubr.f32.gmra.mrb[0].mxu0 %v1564
      %v1777 = vpop.f32.mrb[0].mxu0
      %v1778 = vadd.f32 %v1483, %v1777
      %v1779 = vpop.f32.mrb[0].mxu0
      %1780 = vmatprep.mubr.f32.mxu0 0.0
      %1781 = vmatmul.mubr.f32.gmra.mrb[0].mxu0 %v1567
      %v1782 = vpop.f32.mrb[0].mxu0
      %v1783 = vadd.f32 %v1483, %v1782
      %v1784 = vpop.f32.mrb[0].mxu0
      %1785 = vmatprep.mubr.f32.mxu0 0.0
      %1786 = vmatmul.mubr.f32.gmra.mrb[0].mxu0 %v1570
      %v1787 = vpop.f32.mrb[0].mxu0
      %v1788 = vadd.f32 %v1483, %v1787
      %v1789 = vpop.f32.mrb[0].mxu0
      %1790 = vmatprep.mubr.f32.mxu0 0.0
      %1791 = vmatmul.mubr.f32.gmra.mrb[0].mxu0 %v1573
      %v1792 = vpop.f32.mrb[0].mxu0
      %v1793 = vadd.f32 %v1483, %v1792
      %v1794 = vpop.f32.mrb[0].mxu0
      %1795 = vmatprep.mubr.f32.mxu0 0.0
      %1796 = vmatmul.mubr.f32.gmra.mrb[0].mxu0 %v1576
      %v1797 = vpop.f32.mrb[0].mxu0
      %v1798 = vadd.f32 %v1483, %v1797
      %v1799 = vpop.f32.mrb[0].mxu0
      %1800 = vmatprep.mubr.f32.mxu0 0.0
      %1801 = vmatmul.mubr.f32.gmra.mrb[0].mxu0 %v1579
      %v1802 = vpop.f32.mrb[0].mxu0
      %v1803 = vadd.f32 %v1483, %v1802
      %v1804 = vpop.f32.mrb[0].mxu0
      %1805 = vdwg.mxu0
      %v1806 = vtanh.pop %v1648
      %v1807 = vtanh.pop %v1653
      %v1808 = vtanh.pop %v1658
      %v1809 = vtanh.pop %v1663
      %v1810 = vtanh.pop %v1668
      %v1811 = vtanh.pop %v1673
      %v1812 = vtanh.pop %v1678
      %v1813 = vtanh.pop %v1683
      %v1814 = vtanh.pop %v1688
      %v1815 = vtanh.pop %v1693
      %v1816 = vtanh.pop %v1698
      %v1817 = vtanh.pop %v1703
      %v1818 = vtanh.pop %v1708
      %v1819 = vtanh.pop %v1713
      %v1820 = vtanh.pop %v1718
      %v1821 = vtanh.pop %v1723
      %v1822 = vtanh.pop %v1728
      %v1823 = vtanh.pop %v1733
      %v1824 = vtanh.pop %v1738
      %v1825 = vtanh.pop %v1743
      %v1826 = vtanh.pop %v1748
      %v1827 = vtanh.pop %v1753
      %v1828 = vtanh.pop %v1758
      %v1829 = vtanh.pop %v1763
      %v1830 = vtanh.pop %v1768
      %v1831 = vtanh.pop %v1773
      %v1832 = vtanh.pop %v1778
      %v1833 = vtanh.pop %v1783
      %v1834 = vtanh.pop %v1788
      %v1835 = vtanh.pop %v1793
      %v1836 = vtanh.pop %v1798
      %v1837 = vtanh.pop %v1803
      %v1839 = vsel %vm59, %v1806, 0
      %v1842 = vsel %vm59, %v1807, 0
      %v1845 = vsel %vm59, %v1808, 0
      %v1848 = vsel %vm59, %v1809, 0
      %v1851 = vsel %vm59, %v1810, 0
      %v1854 = vsel %vm59, %v1811, 0
      %v1857 = vsel %vm59, %v1812, 0
      %v1860 = vsel %vm59, %v1813, 0
      %v1863 = vsel %vm59, %v1814, 0
      %v1866 = vsel %vm59, %v1815, 0
      %v1869 = vsel %vm59, %v1816, 0
      %v1872 = vsel %vm59, %v1817, 0
      %v1875 = vsel %vm59, %v1818, 0
      %v1878 = vsel %vm59, %v1819, 0
      %v1881 = vsel %vm59, %v1820, 0
      %v1884 = vsel %vm59, %v1821, 0
      %v1887 = vsel %vm59, %v1822, 0
      %v1890 = vsel %vm59, %v1823, 0
      %v1893 = vsel %vm59, %v1824, 0
      %v1896 = vsel %vm59, %v1825, 0
      %v1899 = vsel %vm59, %v1826, 0
      %v1902 = vsel %vm59, %v1827, 0
      %v1905 = vsel %vm59, %v1828, 0
      %v1908 = vsel %vm59, %v1829, 0
      %v1911 = vsel %vm59, %v1830, 0
      %v1914 = vsel %vm59, %v1831, 0
      %v1917 = vsel %vm59, %v1832, 0
      %v1920 = vsel %vm59, %v1833, 0
      %v1923 = vsel %vm59, %v1834, 0
      %v1926 = vsel %vm59, %v1835, 0
      %v1929 = vsel %vm59, %v1836, 0
      %v1932 = vsel %vm59, %v1837, 0
      %1934 = vmatprep.subr.mxu0 0.0
      %1935 = vmatpush1.msra.mxu0 %v258
      %1936 = vmatprep.subr.mxu0 0.0
      %1937 = vmatpush1.msra.mxu0 %v259
      %1938 = vmatprep.subr.mxu0 0.0
      %1939 = vmatpush1.msra.mxu0 0.0
      %1940 = vmatprep.subr.mxu0 0.0
      %1941 = vmatpush1.msra.mxu0 0.0
      %1942 = vmatprep.subr.mxu0 0.0
      %1943 = vmatpush1.msra.mxu0 0.0
      %1944 = vmatprep.subr.mxu0 0.0
      %1945 = vmatpush1.msra.mxu0 0.0
      %1946 = vmatprep.subr.mxu0 0.0
      %1947 = vmatpush1.msra.mxu0 0.0
      %1948 = vmatprep.subr.mxu0 0.0
      %1949 = vmatpush1.msra.mxu0 0.0
      %1950 = vmatprep.subr.mxu0 0.0
      %1951 = vmatpush1.msra.mxu0 0.0
      %1952 = vmatprep.subr.mxu0 0.0
      %1953 = vmatpush1.msra.mxu0 0.0
      %1954 = vmatprep.subr.mxu0 0.0
      %1955 = vmatpush1.msra.mxu0 0.0
      %1956 = vmatprep.subr.mxu0 0.0
      %1957 = vmatpush1.msra.mxu0 0.0
      %1958 = vmatprep.subr.mxu0 0.0
      %1959 = vmatpush1.msra.mxu0 0.0
      %1960 = vmatprep.subr.mxu0 0.0
      %1961 = vmatpush1.msra.mxu0 0.0
      %1962 = vmatprep.subr.mxu0 0.0
      %1963 = vmatpush1.msra.mxu0 0.0
      %1964 = vmatprep.subr.mxu0 0.0
      %1965 = vmatpush1.msra.mxu0 0.0
      %1966 = vmatprep.subr.mxu0 0.0
      %1967 = vmatpush1.msra.mxu0 0.0
      %1968 = vmatprep.subr.mxu0 0.0
      %1969 = vmatpush1.msra.mxu0 0.0
      %1970 = vmatprep.subr.mxu0 0.0
      %1971 = vmatpush1.msra.mxu0 0.0
      %1972 = vmatprep.subr.mxu0 0.0
      %1973 = vmatpush1.msra.mxu0 0.0
      %1974 = vmatprep.subr.mxu0 0.0
      %1975 = vmatpush1.msra.mxu0 0.0
      %1976 = vmatprep.subr.mxu0 0.0
      %1977 = vmatpush1.msra.mxu0 0.0
      %1978 = vmatprep.subr.mxu0 0.0
      %1979 = vmatpush1.msra.mxu0 0.0
      %1980 = vmatprep.subr.mxu0 0.0
      %1981 = vmatpush1.msra.mxu0 0.0
      %1982 = vmatprep.subr.mxu0 0.0
      %1983 = vmatpush1.msra.mxu0 0.0
      %1984 = vmatprep.subr.mxu0 0.0
      %1985 = vmatpush1.msra.mxu0 0.0
      %1986 = vmatprep.subr.mxu0 0.0
      %1987 = vmatpush1.msra.mxu0 0.0
      %1988 = vmatprep.subr.mxu0 0.0
      %1989 = vmatpush1.msra.mxu0 0.0
      %1990 = vmatprep.subr.mxu0 0.0
      %1991 = vmatpush1.msra.mxu0 0.0
      %1992 = vmatprep.subr.mxu0 0.0
      %1993 = vmatpush1.msra.mxu0 0.0
      %1994 = vmatprep.subr.mxu0 0.0
      %1995 = vmatpush1.msra.mxu0 0.0
      %1996 = vmatprep.subr.mxu0 0.0
      %1997 = vmatpush1.msra.mxu0 0.0
      %1998 = vmatprep.mubr.f32.mxu0 0.0
      %1999 = vmatmul.mubr.f32.gmra.mrb[0].mxu0 %v1839
      %v2000 = vpop.f32.mrb[0].mxu0
      %v2001 = vadd.f32 0.0, %v2000
      %v2002 = vpop.f32.mrb[0].mxu0
      %2003 = vmatprep.mubr.f32.mxu0 0.0
      %2004 = vmatmul.mubr.f32.gmra.mrb[0].mxu0 %v1842
      %v2005 = vpop.f32.mrb[0].mxu0
      %v2006 = vadd.f32 0.0, %v2005
      %v2007 = vpop.f32.mrb[0].mxu0
      %2008 = vmatprep.mubr.f32.mxu0 0.0
      %2009 = vmatmul.mubr.f32.gmra.mrb[0].mxu0 %v1845
      %v2010 = vpop.f32.mrb[0].mxu0
      %v2011 = vadd.f32 0.0, %v2010
      %v2012 = vpop.f32.mrb[0].mxu0
      %2013 = vmatprep.mubr.f32.mxu0 0.0
      %2014 = vmatmul.mubr.f32.gmra.mrb[0].mxu0 %v1848
      %v2015 = vpop.f32.mrb[0].mxu0
      %v2016 = vadd.f32 0.0, %v2015
      %v2017 = vpop.f32.mrb[0].mxu0
      %2018 = vmatprep.mubr.f32.mxu0 0.0
      %2019 = vmatmul.mubr.f32.gmra.mrb[0].mxu0 %v1851
      %v2020 = vpop.f32.mrb[0].mxu0
      %v2021 = vadd.f32 0.0, %v2020
      %v2022 = vpop.f32.mrb[0].mxu0
      %2023 = vmatprep.mubr.f32.mxu0 0.0
      %2024 = vmatmul.mubr.f32.gmra.mrb[0].mxu0 %v1854
      %v2025 = vpop.f32.mrb[0].mxu0
      %v2026 = vadd.f32 0.0, %v2025
      %v2027 = vpop.f32.mrb[0].mxu0
      %2028 = vmatprep.mubr.f32.mxu0 0.0
      %2029 = vmatmul.mubr.f32.gmra.mrb[0].mxu0 %v1857
      %v2030 = vpop.f32.mrb[0].mxu0
      %v2031 = vadd.f32 0.0, %v2030
      %v2032 = vpop.f32.mrb[0].mxu0
      %2033 = vmatprep.mubr.f32.mxu0 0.0
      %2034 = vmatmul.mubr.f32.gmra.mrb[0].mxu0 %v1860
      %v2035 = vpop.f32.mrb[0].mxu0
      %v2036 = vadd.f32 0.0, %v2035
      %v2037 = vpop.f32.mrb[0].mxu0
      %2038 = vmatprep.mubr.f32.mxu0 0.0
      %2039 = vmatmul.mubr.f32.gmra.mrb[0].mxu0 %v1863
      %v2040 = vpop.f32.mrb[0].mxu0
      %v2041 = vadd.f32 0.0, %v2040
      %v2042 = vpop.f32.mrb[0].mxu0
      %2043 = vmatprep.mubr.f32.mxu0 0.0
      %2044 = vmatmul.mubr.f32.gmra.mrb[0].mxu0 %v1866
      %v2045 = vpop.f32.mrb[0].mxu0
      %v2046 = vadd.f32 0.0, %v2045
      %v2047 = vpop.f32.mrb[0].mxu0
      %2048 = vmatprep.mubr.f32.mxu0 0.0
      %2049 = vmatmul.mubr.f32.gmra.mrb[0].mxu0 %v1869
      %v2050 = vpop.f32.mrb[0].mxu0
      %v2051 = vadd.f32 0.0, %v2050
      %v2052 = vpop.f32.mrb[0].mxu0
      %2053 = vmatprep.mubr.f32.mxu0 0.0
      %2054 = vmatmul.mubr.f32.gmra.mrb[0].mxu0 %v1872
      %v2055 = vpop.f32.mrb[0].mxu0
      %v2056 = vadd.f32 0.0, %v2055
      %v2057 = vpop.f32.mrb[0].mxu0
      %2058 = vmatprep.mubr.f32.mxu0 0.0
      %2059 = vmatmul.mubr.f32.gmra.mrb[0].mxu0 %v1875
      %v2060 = vpop.f32.mrb[0].mxu0
      %v2061 = vadd.f32 0.0, %v2060
      %v2062 = vpop.f32.mrb[0].mxu0
      %2063 = vmatprep.mubr.f32.mxu0 0.0
      %2064 = vmatmul.mubr.f32.gmra.mrb[0].mxu0 %v1878
      %v2065 = vpop.f32.mrb[0].mxu0
      %v2066 = vadd.f32 0.0, %v2065
      %v2067 = vpop.f32.mrb[0].mxu0
      %2068 = vmatprep.mubr.f32.mxu0 0.0
      %2069 = vmatmul.mubr.f32.gmra.mrb[0].mxu0 %v1881
      %v2070 = vpop.f32.mrb[0].mxu0
      %v2071 = vadd.f32 0.0, %v2070
      %v2072 = vpop.f32.mrb[0].mxu0
      %2073 = vmatprep.mubr.f32.mxu0 0.0
      %2074 = vmatmul.mubr.f32.gmra.mrb[0].mxu0 %v1884
      %v2075 = vpop.f32.mrb[0].mxu0
      %v2076 = vadd.f32 0.0, %v2075
      %v2077 = vpop.f32.mrb[0].mxu0
      %2078 = vmatprep.mubr.f32.mxu0 0.0
      %2079 = vmatmul.mubr.f32.gmra.mrb[0].mxu0 %v1887
      %v2080 = vpop.f32.mrb[0].mxu0
      %v2081 = vadd.f32 0.0, %v2080
      %v2082 = vpop.f32.mrb[0].mxu0
      %2083 = vmatprep.mubr.f32.mxu0 0.0
      %2084 = vmatmul.mubr.f32.gmra.mrb[0].mxu0 %v1890
      %v2085 = vpop.f32.mrb[0].mxu0
      %v2086 = vadd.f32 0.0, %v2085
      %v2087 = vpop.f32.mrb[0].mxu0
      %2088 = vmatprep.mubr.f32.mxu0 0.0
      %2089 = vmatmul.mubr.f32.gmra.mrb[0].mxu0 %v1893
      %v2090 = vpop.f32.mrb[0].mxu0
      %v2091 = vadd.f32 0.0, %v2090
      %v2092 = vpop.f32.mrb[0].mxu0
      %2093 = vmatprep.mubr.f32.mxu0 0.0
      %2094 = vmatmul.mubr.f32.gmra.mrb[0].mxu0 %v1896
      %v2095 = vpop.f32.mrb[0].mxu0
      %v2096 = vadd.f32 0.0, %v2095
      %v2097 = vpop.f32.mrb[0].mxu0
      %2098 = vmatprep.mubr.f32.mxu0 0.0
      %2099 = vmatmul.mubr.f32.gmra.mrb[0].mxu0 %v1899
      %v2100 = vpop.f32.mrb[0].mxu0
      %v2101 = vadd.f32 0.0, %v2100
      %v2102 = vpop.f32.mrb[0].mxu0
      %2103 = vmatprep.mubr.f32.mxu0 0.0
      %2104 = vmatmul.mubr.f32.gmra.mrb[0].mxu0 %v1902
      %v2105 = vpop.f32.mrb[0].mxu0
      %v2106 = vadd.f32 0.0, %v2105
      %v2107 = vpop.f32.mrb[0].mxu0
      %2108 = vmatprep.mubr.f32.mxu0 0.0
      %2109 = vmatmul.mubr.f32.gmra.mrb[0].mxu0 %v1905
      %v2110 = vpop.f32.mrb[0].mxu0
      %v2111 = vadd.f32 0.0, %v2110
      %v2112 = vpop.f32.mrb[0].mxu0
      %2113 = vmatprep.mubr.f32.mxu0 0.0
      %2114 = vmatmul.mubr.f32.gmra.mrb[0].mxu0 %v1908
      %v2115 = vpop.f32.mrb[0].mxu0
      %v2116 = vadd.f32 0.0, %v2115
      %v2117 = vpop.f32.mrb[0].mxu0
      %2118 = vmatprep.mubr.f32.mxu0 0.0
      %2119 = vmatmul.mubr.f32.gmra.mrb[0].mxu0 %v1911
      %v2120 = vpop.f32.mrb[0].mxu0
      %v2121 = vadd.f32 0.0, %v2120
      %v2122 = vpop.f32.mrb[0].mxu0
      %2123 = vmatprep.mubr.f32.mxu0 0.0
      %2124 = vmatmul.mubr.f32.gmra.mrb[0].mxu0 %v1914
      %v2125 = vpop.f32.mrb[0].mxu0
      %v2126 = vadd.f32 0.0, %v2125
      %v2127 = vpop.f32.mrb[0].mxu0
      %2128 = vmatprep.mubr.f32.mxu0 0.0
      %2129 = vmatmul.mubr.f32.gmra.mrb[0].mxu0 %v1917
      %v2130 = vpop.f32.mrb[0].mxu0
      %v2131 = vadd.f32 0.0, %v2130
      %v2132 = vpop.f32.mrb[0].mxu0
      %2133 = vmatprep.mubr.f32.mxu0 0.0
      %2134 = vmatmul.mubr.f32.gmra.mrb[0].mxu0 %v1920
      %v2135 = vpop.f32.mrb[0].mxu0
      %v2136 = vadd.f32 0.0, %v2135
      %v2137 = vpop.f32.mrb[0].mxu0
      %2138 = vmatprep.mubr.f32.mxu0 0.0
      %2139 = vmatmul.mubr.f32.gmra.mrb[0].mxu0 %v1923
      %v2140 = vpop.f32.mrb[0].mxu0
      %v2141 = vadd.f32 0.0, %v2140
      %v2142 = vpop.f32.mrb[0].mxu0
      %2143 = vmatprep.mubr.f32.mxu0 0.0
      %2144 = vmatmul.mubr.f32.gmra.mrb[0].mxu0 %v1926
      %v2145 = vpop.f32.mrb[0].mxu0
      %v2146 = vadd.f32 0.0, %v2145
      %v2147 = vpop.f32.mrb[0].mxu0
      %2148 = vmatprep.mubr.f32.mxu0 0.0
      %2149 = vmatmul.mubr.f32.gmra.mrb[0].mxu0 %v1929
      %v2150 = vpop.f32.mrb[0].mxu0
      %v2151 = vadd.f32 0.0, %v2150
      %v2152 = vpop.f32.mrb[0].mxu0
      %2153 = vmatprep.mubr.f32.mxu0 0.0
      %2154 = vmatmul.mubr.f32.gmra.mrb[0].mxu0 %v1932
      %v2155 = vpop.f32.mrb[0].mxu0
      %v2156 = vadd.f32 0.0, %v2155
      %v2157 = vpop.f32.mrb[0].mxu0
      %2158 = vdwg.mxu0
      %v2159 = vtanh.pop %v2001
      %v2160 = vtanh.pop %v2006
      %v2161 = vtanh.pop %v2011
      %v2162 = vtanh.pop %v2016
      %v2163 = vtanh.pop %v2021
      %v2164 = vtanh.pop %v2026
      %v2165 = vtanh.pop %v2031
      %v2166 = vtanh.pop %v2036
      %v2167 = vtanh.pop %v2041
      %v2168 = vtanh.pop %v2046
      %v2169 = vtanh.pop %v2051
      %v2170 = vtanh.pop %v2056
      %v2171 = vtanh.pop %v2061
      %v2172 = vtanh.pop %v2066
      %v2173 = vtanh.pop %v2071
      %v2174 = vtanh.pop %v2076
      %v2175 = vtanh.pop %v2081
      %v2176 = vtanh.pop %v2086
      %v2177 = vtanh.pop %v2091
      %v2178 = vtanh.pop %v2096
      %v2179 = vtanh.pop %v2101
      %v2180 = vtanh.pop %v2106
      %v2181 = vtanh.pop %v2111
      %v2182 = vtanh.pop %v2116
      %v2183 = vtanh.pop %v2121
      %v2184 = vtanh.pop %v2126
      %v2185 = vtanh.pop %v2131
      %v2186 = vtanh.pop %v2136
      %v2187 = vtanh.pop %v2141
      %v2188 = vtanh.pop %v2146
      %v2189 = vtanh.pop %v2151
      %v2190 = vtanh.pop %v2156
      %v2191 = vmul.f32 %v57, %v432
      %v2192 = vmul.f32 %v58, %v434
      %2225 = vset.pattern.permute.xlu0 0
      %2226 = vperm.xlu0 %2225, %v2159
      %v2227 = vpop.permute.xlu0 %2226
      %2228 = vset.pattern.permute.xlu0 0
      %2229 = vperm.xlu0 %2228, %v2160
      %v2230 = vpop.permute.xlu0 %2229
      %2231 = vset.pattern.permute.xlu0 0
      %2232 = vperm.xlu0 %2231, %v2161
      %v2233 = vpop.permute.xlu0 %2232
      %2234 = vset.pattern.permute.xlu0 0
      %2235 = vperm.xlu0 %2234, %v2162
      %v2236 = vpop.permute.xlu0 %2235
      %2237 = vset.pattern.permute.xlu0 0
      %2238 = vperm.xlu0 %2237, %v2163
      %v2239 = vpop.permute.xlu0 %2238
      %2240 = vset.pattern.permute.xlu0 0
      %2241 = vperm.xlu0 %2240, %v2164
      %v2242 = vpop.permute.xlu0 %2241
      %2243 = vset.pattern.permute.xlu0 0
      %2244 = vperm.xlu0 %2243, %v2165
      %v2245 = vpop.permute.xlu0 %2244
      %2246 = vset.pattern.permute.xlu0 0
      %2247 = vperm.xlu0 %2246, %v2166
      %v2248 = vpop.permute.xlu0 %2247
      %2249 = vset.pattern.permute.xlu0 0
      %2250 = vperm.xlu0 %2249, %v2167
      %v2251 = vpop.permute.xlu0 %2250
      %2252 = vset.pattern.permute.xlu0 0
      %2253 = vperm.xlu0 %2252, %v2168
      %v2254 = vpop.permute.xlu0 %2253
      %2255 = vset.pattern.permute.xlu0 0
      %2256 = vperm.xlu0 %2255, %v2169
      %v2257 = vpop.permute.xlu0 %2256
      %2258 = vset.pattern.permute.xlu0 0
      %2259 = vperm.xlu0 %2258, %v2170
      %v2260 = vpop.permute.xlu0 %2259
      %2261 = vset.pattern.permute.xlu0 0
      %2262 = vperm.xlu0 %2261, %v2171
      %v2263 = vpop.permute.xlu0 %2262
      %2264 = vset.pattern.permute.xlu0 0
      %2265 = vperm.xlu0 %2264, %v2172
      %v2266 = vpop.permute.xlu0 %2265
      %2267 = vset.pattern.permute.xlu0 0
      %2268 = vperm.xlu0 %2267, %v2173
      %v2269 = vpop.permute.xlu0 %2268
      %2270 = vset.pattern.permute.xlu0 0
      %2271 = vperm.xlu0 %2270, %v2174
      %v2272 = vpop.permute.xlu0 %2271
      %2273 = vset.pattern.permute.xlu0 0
      %2274 = vperm.xlu0 %2273, %v2175
      %v2275 = vpop.permute.xlu0 %2274
      %2276 = vset.pattern.permute.xlu0 0
      %2277 = vperm.xlu0 %2276, %v2176
      %v2278 = vpop.permute.xlu0 %2277
      %2279 = vset.pattern.permute.xlu0 0
      %2280 = vperm.xlu0 %2279, %v2177
      %v2281 = vpop.permute.xlu0 %2280
      %2282 = vset.pattern.permute.xlu0 0
      %2283 = vperm.xlu0 %2282, %v2178
      %v2284 = vpop.permute.xlu0 %2283
      %2285 = vset.pattern.permute.xlu0 0
      %2286 = vperm.xlu0 %2285, %v2179
      %v2287 = vpop.permute.xlu0 %2286
      %2288 = vset.pattern.permute.xlu0 0
      %2289 = vperm.xlu0 %2288, %v2180
      %v2290 = vpop.permute.xlu0 %2289
      %2291 = vset.pattern.permute.xlu0 0
      %2292 = vperm.xlu0 %2291, %v2181
      %v2293 = vpop.permute.xlu0 %2292
      %2294 = vset.pattern.permute.xlu0 0
      %2295 = vperm.xlu0 %2294, %v2182
      %v2296 = vpop.permute.xlu0 %2295
      %2297 = vset.pattern.permute.xlu0 0
      %2298 = vperm.xlu0 %2297, %v2183
      %v2299 = vpop.permute.xlu0 %2298
      %2300 = vset.pattern.permute.xlu0 0
      %2301 = vperm.xlu0 %2300, %v2184
      %v2302 = vpop.permute.xlu0 %2301
      %2303 = vset.pattern.permute.xlu0 0
      %2304 = vperm.xlu0 %2303, %v2185
      %v2305 = vpop.permute.xlu0 %2304
      %2306 = vset.pattern.permute.xlu0 0
      %2307 = vperm.xlu0 %2306, %v2186
      %v2308 = vpop.permute.xlu0 %2307
      %2309 = vset.pattern.permute.xlu0 0
      %2310 = vperm.xlu0 %2309, %v2187
      %v2311 = vpop.permute.xlu0 %2310
      %2312 = vset.pattern.permute.xlu0 0
      %2313 = vperm.xlu0 %2312, %v2188
      %v2314 = vpop.permute.xlu0 %2313
      %2315 = vset.pattern.permute.xlu0 0
      %2316 = vperm.xlu0 %2315, %v2189
      %v2317 = vpop.permute.xlu0 %2316
      %2318 = vset.pattern.permute.xlu0 0
      %2319 = vperm.xlu0 %2318, %v2190
      %v2320 = vpop.permute.xlu0 %2319
      %v2321 = vlaneseq
      %v2322 = vand.u32 %v2321, 127
      %v2323 = vlaneseq
      %v2324 = vshrl.u32 %v2323, 7
      %v2325 = vsub.s32 %v2322, %v2324
      %v2326 = vrot.slane %v2227, %v2325
      %v2327 = vadd.s32 %v2322, 4294967288
      %v2328 = vlaneseq
      %v2329 = vshrl.u32 %v2328, 7
      %v2330 = vsub.s32 %v2327, %v2329
      %v2331 = vrot.slane %v2230, %v2330
      %vm2332 = vcmask 130112
      %v2333 = vsel %vm2332, %v2331, %v2326
      %v2334 = vlaneseq
      %v2335 = vshrl.u32 %v2334, 7
      %v2336 = vsub.s32 %v2322, %v2335
      %v2337 = vrot.slane %v2233, %v2336
      %v2338 = vlaneseq
      %v2339 = vshrl.u32 %v2338, 7
      %v2340 = vsub.s32 %v2327, %v2339
      %v2341 = vrot.slane %v2236, %v2340
      %v2342 = vsel %vm2332, %v2341, %v2337
      %v2343 = vlaneseq
      %v2344 = vshrl.u32 %v2343, 7
      %v2345 = vsub.s32 %v2322, %v2344
      %v2346 = vrot.slane %v2239, %v2345
      %v2347 = vlaneseq
      %v2348 = vshrl.u32 %v2347, 7
      %v2349 = vsub.s32 %v2327, %v2348
      %v2350 = vrot.slane %v2242, %v2349
      %v2351 = vsel %vm2332, %v2350, %v2346
      %v2352 = vlaneseq
      %v2353 = vshrl.u32 %v2352, 7
      %v2354 = vsub.s32 %v2322, %v2353
      %v2355 = vrot.slane %v2245, %v2354
      %v2356 = vlaneseq
      %v2357 = vshrl.u32 %v2356, 7
      %v2358 = vsub.s32 %v2327, %v2357
      %v2359 = vrot.slane %v2248, %v2358
      %v2360 = vsel %vm2332, %v2359, %v2355
      %v2361 = vlaneseq
      %v2362 = vshrl.u32 %v2361, 7
      %v2363 = vsub.s32 %v2322, %v2362
      %v2364 = vrot.slane %v2251, %v2363
      %v2365 = vlaneseq
      %v2366 = vshrl.u32 %v2365, 7
      %v2367 = vsub.s32 %v2327, %v2366
      %v2368 = vrot.slane %v2254, %v2367
      %v2369 = vsel %vm2332, %v2368, %v2364
      %v2370 = vlaneseq
      %v2371 = vshrl.u32 %v2370, 7
      %v2372 = vsub.s32 %v2322, %v2371
      %v2373 = vrot.slane %v2257, %v2372
      %v2374 = vlaneseq
      %v2375 = vshrl.u32 %v2374, 7
      %v2376 = vsub.s32 %v2327, %v2375
      %v2377 = vrot.slane %v2260, %v2376
      %v2378 = vsel %vm2332, %v2377, %v2373
      %v2379 = vlaneseq
      %v2380 = vshrl.u32 %v2379, 7
      %v2381 = vsub.s32 %v2322, %v2380
      %v2382 = vrot.slane %v2263, %v2381
      %v2383 = vlaneseq
      %v2384 = vshrl.u32 %v2383, 7
      %v2385 = vsub.s32 %v2327, %v2384
      %v2386 = vrot.slane %v2266, %v2385
      %v2387 = vsel %vm2332, %v2386, %v2382
      %v2388 = vlaneseq
      %v2389 = vshrl.u32 %v2388, 7
      %v2390 = vsub.s32 %v2322, %v2389
      %v2391 = vrot.slane %v2269, %v2390
      %v2392 = vlaneseq
      %v2393 = vshrl.u32 %v2392, 7
      %v2394 = vsub.s32 %v2327, %v2393
      %v2395 = vrot.slane %v2272, %v2394
      %v2396 = vsel %vm2332, %v2395, %v2391
      %v2397 = vlaneseq
      %v2398 = vshrl.u32 %v2397, 7
      %v2399 = vsub.s32 %v2322, %v2398
      %v2400 = vrot.slane %v2275, %v2399
      %v2401 = vlaneseq
      %v2402 = vshrl.u32 %v2401, 7
      %v2403 = vsub.s32 %v2327, %v2402
      %v2404 = vrot.slane %v2278, %v2403
      %v2405 = vsel %vm2332, %v2404, %v2400
      %v2406 = vlaneseq
      %v2407 = vshrl.u32 %v2406, 7
      %v2408 = vsub.s32 %v2322, %v2407
      %v2409 = vrot.slane %v2281, %v2408
      %v2410 = vlaneseq
      %v2411 = vshrl.u32 %v2410, 7
      %v2412 = vsub.s32 %v2327, %v2411
      %v2413 = vrot.slane %v2284, %v2412
      %v2414 = vsel %vm2332, %v2413, %v2409
      %v2415 = vlaneseq
      %v2416 = vshrl.u32 %v2415, 7
      %v2417 = vsub.s32 %v2322, %v2416
      %v2418 = vrot.slane %v2287, %v2417
      %v2419 = vlaneseq
      %v2420 = vshrl.u32 %v2419, 7
      %v2421 = vsub.s32 %v2327, %v2420
      %v2422 = vrot.slane %v2290, %v2421
      %v2423 = vsel %vm2332, %v2422, %v2418
      %v2424 = vlaneseq
      %v2425 = vshrl.u32 %v2424, 7
      %v2426 = vsub.s32 %v2322, %v2425
      %v2427 = vrot.slane %v2293, %v2426
      %v2428 = vlaneseq
      %v2429 = vshrl.u32 %v2428, 7
      %v2430 = vsub.s32 %v2327, %v2429
      %v2431 = vrot.slane %v2296, %v2430
      %v2432 = vsel %vm2332, %v2431, %v2427
      %v2433 = vlaneseq
      %v2434 = vshrl.u32 %v2433, 7
      %v2435 = vsub.s32 %v2322, %v2434
      %v2436 = vrot.slane %v2299, %v2435
      %v2437 = vlaneseq
      %v2438 = vshrl.u32 %v2437, 7
      %v2439 = vsub.s32 %v2327, %v2438
      %v2440 = vrot.slane %v2302, %v2439
      %v2441 = vsel %vm2332, %v2440, %v2436
      %v2442 = vlaneseq
      %v2443 = vshrl.u32 %v2442, 7
      %v2444 = vsub.s32 %v2322, %v2443
      %v2445 = vrot.slane %v2305, %v2444
      %v2446 = vlaneseq
      %v2447 = vshrl.u32 %v2446, 7
      %v2448 = vsub.s32 %v2327, %v2447
      %v2449 = vrot.slane %v2308, %v2448
      %v2450 = vsel %vm2332, %v2449, %v2445
      %v2451 = vlaneseq
      %v2452 = vshrl.u32 %v2451, 7
      %v2453 = vsub.s32 %v2322, %v2452
      %v2454 = vrot.slane %v2311, %v2453
      %v2455 = vlaneseq
      %v2456 = vshrl.u32 %v2455, 7
      %v2457 = vsub.s32 %v2327, %v2456
      %v2458 = vrot.slane %v2314, %v2457
      %v2459 = vsel %vm2332, %v2458, %v2454
      %v2460 = vlaneseq
      %v2461 = vshrl.u32 %v2460, 7
      %v2462 = vsub.s32 %v2322, %v2461
      %v2463 = vrot.slane %v2317, %v2462
      %v2464 = vlaneseq
      %v2465 = vshrl.u32 %v2464, 7
      %v2466 = vsub.s32 %v2327, %v2465
      %v2467 = vrot.slane %v2320, %v2466
      %v2468 = vsel %vm2332, %v2467, %v2463
      %vm2469 = vcmask 1041409
      %v2470 = vsel %vm2469, %v2342, %v2333
      %vm2471 = vcmask 1042434
      %v2472 = vsel %vm2471, %v2351, %v2470
      %vm2473 = vcmask 1043459
      %v2474 = vsel %vm2473, %v2360, %v2472
      %vm2475 = vcmask 1044484
      %v2476 = vsel %vm2475, %v2369, %v2474
      %vm2477 = vcmask 1045509
      %v2478 = vsel %vm2477, %v2378, %v2476
      %vm2479 = vcmask 1046534
      %v2480 = vsel %vm2479, %v2387, %v2478
      %vm2481 = vcmask 1047559
      %v2482 = vsel %vm2481, %v2396, %v2480
      %v2483 = vsel %vm2469, %v2414, %v2405
      %v2484 = vsel %vm2471, %v2423, %v2483
      %v2485 = vsel %vm2473, %v2432, %v2484
      %v2486 = vsel %vm2475, %v2441, %v2485
      %v2487 = vsel %vm2477, %v2450, %v2486
      %v2488 = vsel %vm2479, %v2459, %v2487
      %v2489 = vsel %vm2481, %v2468, %v2488
      %v2492 = vmul.f32 %v2191, %v2482
      %v2493 = vmul.f32 %v2192, %v2489
      %v2494 = vsel %vm59, %v2492, 0.0
      %2495 = vadd.xlane.f32.xlu0 %v2494
      %v2496 = vpop.xlane.xlu0 %2495
      %v2497 = vsel %vm59, %v2493, 0.0
      %2498 = vadd.xlane.f32.xlu0 %v2497
      %v2499 = vpop.xlane.xlu0 %2498
      %v2501 = vsel %vm59, %v2492, 0
      %v2504 = vsel %vm59, %v2493, 0
      %2506 = vmatprep.subr.mxu0 0.0
      %2507 = vmatpush1.msra.mxu0 %v277
      %2508 = vmatprep.subr.mxu0 0.0
      %2509 = vmatpush1.msra.mxu0 %v278
      %2510 = vmatprep.subr.mxu0 0.0
      %2511 = vmatpush1.msra.mxu0 0.0
      %2512 = vmatprep.subr.mxu0 0.0
      %2513 = vmatpush1.msra.mxu0 0.0
      %2514 = vmatprep.subr.mxu0 0.0
      %2515 = vmatpush1.msra.mxu0 0.0
      %2516 = vmatprep.subr.mxu0 0.0
      %2517 = vmatpush1.msra.mxu0 0.0
      %2518 = vmatprep.subr.mxu0 0.0
      %2519 = vmatpush1.msra.mxu0 0.0
      %2520 = vmatprep.subr.mxu0 0.0
      %2521 = vmatpush1.msra.mxu0 0.0
      %2522 = vmatprep.subr.mxu0 0.0
      %2523 = vmatpush1.msra.mxu0 0.0
      %2524 = vmatprep.subr.mxu0 0.0
      %2525 = vmatpush1.msra.mxu0 0.0
      %2526 = vmatprep.subr.mxu0 0.0
      %2527 = vmatpush1.msra.mxu0 0.0
      %2528 = vmatprep.subr.mxu0 0.0
      %2529 = vmatpush1.msra.mxu0 0.0
      %2530 = vmatprep.subr.mxu0 0.0
      %2531 = vmatpush1.msra.mxu0 0.0
      %2532 = vmatprep.subr.mxu0 0.0
      %2533 = vmatpush1.msra.mxu0 0.0
      %2534 = vmatprep.subr.mxu0 0.0
      %2535 = vmatpush1.msra.mxu0 0.0
      %2536 = vmatprep.subr.mxu0 0.0
      %2537 = vmatpush1.msra.mxu0 0.0
      %2538 = vmatprep.subr.mxu0 0.0
      %2539 = vmatpush1.msra.mxu0 0.0
      %2540 = vmatprep.subr.mxu0 0.0
      %2541 = vmatpush1.msra.mxu0 0.0
      %2542 = vmatprep.subr.mxu0 0.0
      %2543 = vmatpush1.msra.mxu0 0.0
      %2544 = vmatprep.subr.mxu0 0.0
      %2545 = vmatpush1.msra.mxu0 0.0
      %2546 = vmatprep.subr.mxu0 0.0
      %2547 = vmatpush1.msra.mxu0 0.0
      %2548 = vmatprep.subr.mxu0 0.0
      %2549 = vmatpush1.msra.mxu0 0.0
      %2550 = vmatprep.subr.mxu0 0.0
      %2551 = vmatpush1.msra.mxu0 0.0
      %2552 = vmatprep.subr.mxu0 0.0
      %2553 = vmatpush1.msra.mxu0 0.0
      %2554 = vmatprep.subr.mxu0 0.0
      %2555 = vmatpush1.msra.mxu0 0.0
      %2556 = vmatprep.subr.mxu0 0.0
      %2557 = vmatpush1.msra.mxu0 0.0
      %2558 = vmatprep.subr.mxu0 0.0
      %2559 = vmatpush1.msra.mxu0 0.0
      %2560 = vmatprep.subr.mxu0 0.0
      %2561 = vmatpush1.msra.mxu0 0.0
      %2562 = vmatprep.subr.mxu0 0.0
      %2563 = vmatpush1.msra.mxu0 0.0
      %2564 = vmatprep.subr.mxu0 0.0
      %2565 = vmatpush1.msra.mxu0 0.0
      %2566 = vmatprep.subr.mxu0 0.0
      %2567 = vmatpush1.msra.mxu0 0.0
      %2568 = vmatprep.subr.mxu0 0.0
      %2569 = vmatpush1.msra.mxu0 0.0
      %2570 = vmatprep.mubr.f32.mxu0 0.0
      %2571 = vmatmul.mubr.f32.gmra.mrb[0].mxu0 %v2501
      %v2572 = vpop.f32.mrb[0].mxu0
      %v2573 = vadd.f32 0.0, %v2572
      %v2574 = vpop.f32.mrb[0].mxu0
      %2575 = vmatprep.mubr.f32.mxu0 0.0
      %2576 = vmatmul.mubr.f32.gmra.mrb[0].mxu0 %v2504
      %v2577 = vpop.f32.mrb[0].mxu0
      %v2578 = vadd.f32 0.0, %v2577
      %v2579 = vpop.f32.mrb[0].mxu0
      %2580 = vdwg.mxu0
      %v2581 = vmul.f32 %v2496, %v277
      %v2582 = vmul.f32 %v2499, %v278
      %v2583 = vsub.f32 %v2581, %v2573
      %v2584 = vsub.f32 %v2582, %v2578
      %v2585 = vmul.f32 %v2583, %v69
      %v2586 = vmul.f32 %v2584, %v71
      %v2587 = vadd.f32 %v277, %v2585
      %v2588 = vadd.f32 %v278, %v2586
      %v2589 = vmul.f32 %v1447, %v78
      %v2590 = vmul.f32 %v1448, %v82
      %v2591 = vmul.f32 %v1449, %v89
      %v2592 = vmul.f32 %v1450, %v93
      %v2593 = vmul.f32 %v1451, %v100
      %v2594 = vmul.f32 %v1452, %v104
      %v2595 = vmul.f32 %v1453, %v111
      %v2596 = vmul.f32 %v1454, %v115
      %v2597 = vmul.f32 %v1455, %v122
      %v2598 = vmul.f32 %v1456, %v126
      %v2599 = vmul.f32 %v1457, %v133
      %v2600 = vmul.f32 %v1458, %v137
      %v2601 = vmul.f32 %v1459, %v144
      %v2602 = vmul.f32 %v1460, %v148
      %v2603 = vmul.f32 %v1461, %v155
      %v2604 = vmul.f32 %v1462, %v159
      %v2605 = vmul.f32 %v1463, %v166
      %v2606 = vmul.f32 %v1464, %v170
      %v2607 = vmul.f32 %v1465, %v177
      %v2608 = vmul.f32 %v1466, %v181
      %v2609 = vmul.f32 %v1467, %v188
      %v2610 = vmul.f32 %v1468, %v192
      %v2611 = vmul.f32 %v1469, %v199
      %v2612 = vmul.f32 %v1470, %v203
      %v2613 = vmul.f32 %v1471, %v210
      %v2614 = vmul.f32 %v1472, %v214
      %v2615 = vmul.f32 %v1473, %v221
      %v2616 = vmul.f32 %v1474, %v225
      %v2617 = vmul.f32 %v1475, %v232
      %v2618 = vmul.f32 %v1476, %v236
      %v2619 = vmul.f32 %v1477, %v243
      %v2620 = vmul.f32 %v1478, %v247
      %v2621 = vsel %vm59, %v2589, 0.0
      %v2622 = vsel %vm59, %v2590, 0.0
      %v2623 = vadd.f32 %v2621, %v2622
      %v2624 = vrot.slane %v2623, 4
      %v2625 = vadd.f32 %v2623, %v2624
      %v2626 = vrot.slane %v2625, 2
      %v2627 = vadd.f32 %v2625, %v2626
      %v2628 = vrot.slane %v2627, 1
      %v2629 = vadd.f32 %v2627, %v2628
      %v2630 = vsel %vm59, %v2591, 0.0
      %v2631 = vsel %vm59, %v2592, 0.0
      %v2632 = vadd.f32 %v2630, %v2631
      %v2633 = vrot.slane %v2632, 4
      %v2634 = vadd.f32 %v2632, %v2633
      %v2635 = vrot.slane %v2634, 2
      %v2636 = vadd.f32 %v2634, %v2635
      %v2637 = vrot.slane %v2636, 1
      %v2638 = vadd.f32 %v2636, %v2637
      %v2639 = vsel %vm59, %v2593, 0.0
      %v2640 = vsel %vm59, %v2594, 0.0
      %v2641 = vadd.f32 %v2639, %v2640
      %v2642 = vrot.slane %v2641, 4
      %v2643 = vadd.f32 %v2641, %v2642
      %v2644 = vrot.slane %v2643, 2
      %v2645 = vadd.f32 %v2643, %v2644
      %v2646 = vrot.slane %v2645, 1
      %v2647 = vadd.f32 %v2645, %v2646
      %v2648 = vsel %vm59, %v2595, 0.0
      %v2649 = vsel %vm59, %v2596, 0.0
      %v2650 = vadd.f32 %v2648, %v2649
      %v2651 = vrot.slane %v2650, 4
      %v2652 = vadd.f32 %v2650, %v2651
      %v2653 = vrot.slane %v2652, 2
      %v2654 = vadd.f32 %v2652, %v2653
      %v2655 = vrot.slane %v2654, 1
      %v2656 = vadd.f32 %v2654, %v2655
      %v2657 = vsel %vm59, %v2597, 0.0
      %v2658 = vsel %vm59, %v2598, 0.0
      %v2659 = vadd.f32 %v2657, %v2658
      %v2660 = vrot.slane %v2659, 4
      %v2661 = vadd.f32 %v2659, %v2660
      %v2662 = vrot.slane %v2661, 2
      %v2663 = vadd.f32 %v2661, %v2662
      %v2664 = vrot.slane %v2663, 1
      %v2665 = vadd.f32 %v2663, %v2664
      %v2666 = vsel %vm59, %v2599, 0.0
      %v2667 = vsel %vm59, %v2600, 0.0
      %v2668 = vadd.f32 %v2666, %v2667
      %v2669 = vrot.slane %v2668, 4
      %v2670 = vadd.f32 %v2668, %v2669
      %v2671 = vrot.slane %v2670, 2
      %v2672 = vadd.f32 %v2670, %v2671
      %v2673 = vrot.slane %v2672, 1
      %v2674 = vadd.f32 %v2672, %v2673
      %v2675 = vsel %vm59, %v2601, 0.0
      %v2676 = vsel %vm59, %v2602, 0.0
      %v2677 = vadd.f32 %v2675, %v2676
      %v2678 = vrot.slane %v2677, 4
      %v2679 = vadd.f32 %v2677, %v2678
      %v2680 = vrot.slane %v2679, 2
      %v2681 = vadd.f32 %v2679, %v2680
      %v2682 = vrot.slane %v2681, 1
      %v2683 = vadd.f32 %v2681, %v2682
      %v2684 = vsel %vm59, %v2603, 0.0
      %v2685 = vsel %vm59, %v2604, 0.0
      %v2686 = vadd.f32 %v2684, %v2685
      %v2687 = vrot.slane %v2686, 4
      %v2688 = vadd.f32 %v2686, %v2687
      %v2689 = vrot.slane %v2688, 2
      %v2690 = vadd.f32 %v2688, %v2689
      %v2691 = vrot.slane %v2690, 1
      %v2692 = vadd.f32 %v2690, %v2691
      %v2693 = vsel %vm59, %v2605, 0.0
      %v2694 = vsel %vm59, %v2606, 0.0
      %v2695 = vadd.f32 %v2693, %v2694
      %v2696 = vrot.slane %v2695, 4
      %v2697 = vadd.f32 %v2695, %v2696
      %v2698 = vrot.slane %v2697, 2
      %v2699 = vadd.f32 %v2697, %v2698
      %v2700 = vrot.slane %v2699, 1
      %v2701 = vadd.f32 %v2699, %v2700
      %v2702 = vsel %vm59, %v2607, 0.0
      %v2703 = vsel %vm59, %v2608, 0.0
      %v2704 = vadd.f32 %v2702, %v2703
      %v2705 = vrot.slane %v2704, 4
      %v2706 = vadd.f32 %v2704, %v2705
      %v2707 = vrot.slane %v2706, 2
      %v2708 = vadd.f32 %v2706, %v2707
      %v2709 = vrot.slane %v2708, 1
      %v2710 = vadd.f32 %v2708, %v2709
      %v2711 = vsel %vm59, %v2609, 0.0
      %v2712 = vsel %vm59, %v2610, 0.0
      %v2713 = vadd.f32 %v2711, %v2712
      %v2714 = vrot.slane %v2713, 4
      %v2715 = vadd.f32 %v2713, %v2714
      %v2716 = vrot.slane %v2715, 2
      %v2717 = vadd.f32 %v2715, %v2716
      %v2718 = vrot.slane %v2717, 1
      %v2719 = vadd.f32 %v2717, %v2718
      %v2720 = vsel %vm59, %v2611, 0.0
      %v2721 = vsel %vm59, %v2612, 0.0
      %v2722 = vadd.f32 %v2720, %v2721
      %v2723 = vrot.slane %v2722, 4
      %v2724 = vadd.f32 %v2722, %v2723
      %v2725 = vrot.slane %v2724, 2
      %v2726 = vadd.f32 %v2724, %v2725
      %v2727 = vrot.slane %v2726, 1
      %v2728 = vadd.f32 %v2726, %v2727
      %v2729 = vsel %vm59, %v2613, 0.0
      %v2730 = vsel %vm59, %v2614, 0.0
      %v2731 = vadd.f32 %v2729, %v2730
      %v2732 = vrot.slane %v2731, 4
      %v2733 = vadd.f32 %v2731, %v2732
      %v2734 = vrot.slane %v2733, 2
      %v2735 = vadd.f32 %v2733, %v2734
      %v2736 = vrot.slane %v2735, 1
      %v2737 = vadd.f32 %v2735, %v2736
      %v2738 = vsel %vm59, %v2615, 0.0
      %v2739 = vsel %vm59, %v2616, 0.0
      %v2740 = vadd.f32 %v2738, %v2739
      %v2741 = vrot.slane %v2740, 4
      %v2742 = vadd.f32 %v2740, %v2741
      %v2743 = vrot.slane %v2742, 2
      %v2744 = vadd.f32 %v2742, %v2743
      %v2745 = vrot.slane %v2744, 1
      %v2746 = vadd.f32 %v2744, %v2745
      %v2747 = vsel %vm59, %v2617, 0.0
      %v2748 = vsel %vm59, %v2618, 0.0
      %v2749 = vadd.f32 %v2747, %v2748
      %v2750 = vrot.slane %v2749, 4
      %v2751 = vadd.f32 %v2749, %v2750
      %v2752 = vrot.slane %v2751, 2
      %v2753 = vadd.f32 %v2751, %v2752
      %v2754 = vrot.slane %v2753, 1
      %v2755 = vadd.f32 %v2753, %v2754
      %v2756 = vsel %vm59, %v2619, 0.0
      %v2757 = vsel %vm59, %v2620, 0.0
      %v2758 = vadd.f32 %v2756, %v2757
      %v2759 = vrot.slane %v2758, 4
      %v2760 = vadd.f32 %v2758, %v2759
      %v2761 = vrot.slane %v2760, 2
      %v2762 = vadd.f32 %v2760, %v2761
      %v2763 = vrot.slane %v2762, 1
      %v2764 = vadd.f32 %v2762, %v2763
      %v2781 = vsel %vm2469, %v2638, %v2629
      %v2782 = vsel %vm2471, %v2647, %v2781
      %v2783 = vsel %vm2473, %v2656, %v2782
      %v2784 = vsel %vm2475, %v2665, %v2783
      %v2785 = vsel %vm2477, %v2674, %v2784
      %v2786 = vsel %vm2479, %v2683, %v2785
      %v2787 = vsel %vm2481, %v2692, %v2786
      %v2788 = vsel %vm2469, %v2710, %v2701
      %v2789 = vsel %vm2471, %v2719, %v2788
      %v2790 = vsel %vm2473, %v2728, %v2789
      %v2791 = vsel %vm2475, %v2737, %v2790
      %v2792 = vsel %vm2477, %v2746, %v2791
      %v2793 = vsel %vm2479, %v2755, %v2792
      %v2794 = vsel %vm2481, %v2764, %v2793
      %v2795 = vsel %vm59, %v2787, 0
      %v2797 = vsel %vm59, %v2794, 0
      %2799 = vmatprep.subr.mxu0 0.0
      %2800 = vmatpush1.msra.mxu0 %v261
      %2801 = vmatprep.subr.mxu0 0.0
      %2802 = vmatpush1.msra.mxu0 %v262
      %2803 = vmatprep.subr.mxu0 0.0
      %2804 = vmatpush1.msra.mxu0 0.0
      %2805 = vmatprep.subr.mxu0 0.0
      %2806 = vmatpush1.msra.mxu0 0.0
      %2807 = vmatprep.subr.mxu0 0.0
      %2808 = vmatpush1.msra.mxu0 0.0
      %2809 = vmatprep.subr.mxu0 0.0
      %2810 = vmatpush1.msra.mxu0 0.0
      %2811 = vmatprep.subr.mxu0 0.0
      %2812 = vmatpush1.msra.mxu0 0.0
      %2813 = vmatprep.subr.mxu0 0.0
      %2814 = vmatpush1.msra.mxu0 0.0
      %2815 = vmatprep.subr.mxu0 0.0
      %2816 = vmatpush1.msra.mxu0 0.0
      %2817 = vmatprep.subr.mxu0 0.0
      %2818 = vmatpush1.msra.mxu0 0.0
      %2819 = vmatprep.subr.mxu0 0.0
      %2820 = vmatpush1.msra.mxu0 0.0
      %2821 = vmatprep.subr.mxu0 0.0
      %2822 = vmatpush1.msra.mxu0 0.0
      %2823 = vmatprep.subr.mxu0 0.0
      %2824 = vmatpush1.msra.mxu0 0.0
      %2825 = vmatprep.subr.mxu0 0.0
      %2826 = vmatpush1.msra.mxu0 0.0
      %2827 = vmatprep.subr.mxu0 0.0
      %2828 = vmatpush1.msra.mxu0 0.0
      %2829 = vmatprep.subr.mxu0 0.0
      %2830 = vmatpush1.msra.mxu0 0.0
      %2831 = vmatprep.subr.mxu0 0.0
      %2832 = vmatpush1.msra.mxu0 0.0
      %2833 = vmatprep.subr.mxu0 0.0
      %2834 = vmatpush1.msra.mxu0 0.0
      %2835 = vmatprep.subr.mxu0 0.0
      %2836 = vmatpush1.msra.mxu0 0.0
      %2837 = vmatprep.subr.mxu0 0.0
      %2838 = vmatpush1.msra.mxu0 0.0
      %2839 = vmatprep.subr.mxu0 0.0
      %2840 = vmatpush1.msra.mxu0 0.0
      %2841 = vmatprep.subr.mxu0 0.0
      %2842 = vmatpush1.msra.mxu0 0.0
      %2843 = vmatprep.subr.mxu0 0.0
      %2844 = vmatpush1.msra.mxu0 0.0
      %2845 = vmatprep.subr.mxu0 0.0
      %2846 = vmatpush1.msra.mxu0 0.0
      %2847 = vmatprep.subr.mxu0 0.0
      %2848 = vmatpush1.msra.mxu0 0.0
      %2849 = vmatprep.subr.mxu0 0.0
      %2850 = vmatpush1.msra.mxu0 0.0
      %2851 = vmatprep.subr.mxu0 0.0
      %2852 = vmatpush1.msra.mxu0 0.0
      %2853 = vmatprep.subr.mxu0 0.0
      %2854 = vmatpush1.msra.mxu0 0.0
      %2855 = vmatprep.subr.mxu0 0.0
      %2856 = vmatpush1.msra.mxu0 0.0
      %2857 = vmatprep.subr.mxu0 0.0
      %2858 = vmatpush1.msra.mxu0 0.0
      %2859 = vmatprep.subr.mxu0 0.0
      %2860 = vmatpush1.msra.mxu0 0.0
      %2861 = vmatprep.subr.mxu0 0.0
      %2862 = vmatpush1.msra.mxu0 0.0
      %2863 = vmatprep.mubr.f32.mxu0 0.0
      %2864 = vmatmul.mubr.f32.gmra.mrb[0].mxu0 %v2795
      %v2865 = vpop.f32.mrb[0].mxu0
      %v2866 = vadd.f32 0.0, %v2865
      %v2867 = vpop.f32.mrb[0].mxu0
      %2868 = vmatprep.mubr.f32.mxu0 0.0
      %2869 = vmatmul.mubr.f32.gmra.mrb[0].mxu0 %v2797
      %v2870 = vpop.f32.mrb[0].mxu0
      %v2871 = vadd.f32 0.0, %v2870
      %v2872 = vpop.f32.mrb[0].mxu0
      %2873 = vdwg.mxu0
      %2874 = vmatprep.subr.mxu0 0.0
      %2875 = vmatpush1.msra.mxu0 %v260
      %2876 = vmatprep.subr.mxu0 0.0
      %2877 = vmatpush1.msra.mxu0 0.0
      %2878 = vmatprep.subr.mxu0 0.0
      %2879 = vmatpush1.msra.mxu0 0.0
      %2880 = vmatprep.subr.mxu0 0.0
      %2881 = vmatpush1.msra.mxu0 0.0
      %2882 = vmatprep.subr.mxu0 0.0
      %2883 = vmatpush1.msra.mxu0 0.0
      %2884 = vmatprep.subr.mxu0 0.0
      %2885 = vmatpush1.msra.mxu0 0.0
      %2886 = vmatprep.subr.mxu0 0.0
      %2887 = vmatpush1.msra.mxu0 0.0
      %2888 = vmatprep.subr.mxu0 0.0
      %2889 = vmatpush1.msra.mxu0 0.0
      %2890 = vmatprep.subr.mxu0 0.0
      %2891 = vmatpush1.msra.mxu0 0.0
      %2892 = vmatprep.subr.mxu0 0.0
      %2893 = vmatpush1.msra.mxu0 0.0
      %2894 = vmatprep.subr.mxu0 0.0
      %2895 = vmatpush1.msra.mxu0 0.0
      %2896 = vmatprep.subr.mxu0 0.0
      %2897 = vmatpush1.msra.mxu0 0.0
      %2898 = vmatprep.subr.mxu0 0.0
      %2899 = vmatpush1.msra.mxu0 0.0
      %2900 = vmatprep.subr.mxu0 0.0
      %2901 = vmatpush1.msra.mxu0 0.0
      %2902 = vmatprep.subr.mxu0 0.0
      %2903 = vmatpush1.msra.mxu0 0.0
      %2904 = vmatprep.subr.mxu0 0.0
      %2905 = vmatpush1.msra.mxu0 0.0
      %2906 = vmatprep.subr.mxu0 0.0
      %2907 = vmatpush1.msra.mxu0 0.0
      %2908 = vmatprep.subr.mxu0 0.0
      %2909 = vmatpush1.msra.mxu0 0.0
      %2910 = vmatprep.subr.mxu0 0.0
      %2911 = vmatpush1.msra.mxu0 0.0
      %2912 = vmatprep.subr.mxu0 0.0
      %2913 = vmatpush1.msra.mxu0 0.0
      %2914 = vmatprep.subr.mxu0 0.0
      %2915 = vmatpush1.msra.mxu0 0.0
      %2916 = vmatprep.subr.mxu0 0.0
      %2917 = vmatpush1.msra.mxu0 0.0
      %2918 = vmatprep.subr.mxu0 0.0
      %2919 = vmatpush1.msra.mxu0 0.0
      %2920 = vmatprep.subr.mxu0 0.0
      %2921 = vmatpush1.msra.mxu0 0.0
      %2922 = vmatprep.subr.mxu0 0.0
      %2923 = vmatpush1.msra.mxu0 0.0
      %2924 = vmatprep.subr.mxu0 0.0
      %2925 = vmatpush1.msra.mxu0 0.0
      %2926 = vmatprep.subr.mxu0 0.0
      %2927 = vmatpush1.msra.mxu0 0.0
      %2928 = vmatprep.subr.mxu0 0.0
      %2929 = vmatpush1.msra.mxu0 0.0
      %2930 = vmatprep.subr.mxu0 0.0
      %2931 = vmatpush1.msra.mxu0 0.0
      %2932 = vmatprep.subr.mxu0 0.0
      %2933 = vmatpush1.msra.mxu0 0.0
      %2934 = vmatprep.subr.mxu0 0.0
      %2935 = vmatpush1.msra.mxu0 0.0
      %2936 = vmatprep.subr.mxu0 0.0
      %2937 = vmatpush1.msra.mxu0 0.0
      %2938 = vmatprep.mubr.f32.mxu0 0.0
      %2939 = vmatmul.mubr.f32.gmra.mrb[0].mxu0 %v437
      %v2940 = vpop.f32.mrb[0].mxu0
      %v2941 = vadd.f32 %v2866, %v2940
      %v2942 = vpop.f32.mrb[0].mxu0
      %2943 = vmatprep.mubr.f32.mxu0 0.0
      %2944 = vmatmul.mubr.f32.gmra.mrb[0].mxu0 %v440
      %v2945 = vpop.f32.mrb[0].mxu0
      %v2946 = vadd.f32 %v2871, %v2945
      %v2947 = vpop.f32.mrb[0].mxu0
      %2948 = vdwg.mxu0
      %v2950 = vlaneseq
      %v2951 = vshrl.u32 %v2950, 7
      %v2952 = vsub.s32 0, %v2951
      %v2953 = vrot.slane %v263, %v2952
      %v2955 = vadd.f32 %v2941, %v2953
      %v2956 = vadd.f32 %v2946, %v2953
      %v2957 = vtanh.pop %v2955
      %v2958 = vtanh.pop %v2956
      %v2960 = vsel %vm59, %v2957, 0
      %v2963 = vsel %vm59, %v2958, 0
      %2965 = vmatprep.subr.mxu0 0.0
      %2966 = vmatpush1.msra.mxu0 %v264
      %2967 = vmatprep.subr.mxu0 0.0
      %2968 = vmatpush1.msra.mxu0 %v265
      %2969 = vmatprep.subr.mxu0 0.0
      %2970 = vmatpush1.msra.mxu0 0.0
      %2971 = vmatprep.subr.mxu0 0.0
      %2972 = vmatpush1.msra.mxu0 0.0
      %2973 = vmatprep.subr.mxu0 0.0
      %2974 = vmatpush1.msra.mxu0 0.0
      %2975 = vmatprep.subr.mxu0 0.0
      %2976 = vmatpush1.msra.mxu0 0.0
      %2977 = vmatprep.subr.mxu0 0.0
      %2978 = vmatpush1.msra.mxu0 0.0
      %2979 = vmatprep.subr.mxu0 0.0
      %2980 = vmatpush1.msra.mxu0 0.0
      %2981 = vmatprep.subr.mxu0 0.0
      %2982 = vmatpush1.msra.mxu0 0.0
      %2983 = vmatprep.subr.mxu0 0.0
      %2984 = vmatpush1.msra.mxu0 0.0
      %2985 = vmatprep.subr.mxu0 0.0
      %2986 = vmatpush1.msra.mxu0 0.0
      %2987 = vmatprep.subr.mxu0 0.0
      %2988 = vmatpush1.msra.mxu0 0.0
      %2989 = vmatprep.subr.mxu0 0.0
      %2990 = vmatpush1.msra.mxu0 0.0
      %2991 = vmatprep.subr.mxu0 0.0
      %2992 = vmatpush1.msra.mxu0 0.0
      %2993 = vmatprep.subr.mxu0 0.0
      %2994 = vmatpush1.msra.mxu0 0.0
      %2995 = vmatprep.subr.mxu0 0.0
      %2996 = vmatpush1.msra.mxu0 0.0
      %2997 = vmatprep.subr.mxu0 0.0
      %2998 = vmatpush1.msra.mxu0 0.0
      %2999 = vmatprep.subr.mxu0 0.0
      %3000 = vmatpush1.msra.mxu0 0.0
      %3001 = vmatprep.subr.mxu0 0.0
      %3002 = vmatpush1.msra.mxu0 0.0
      %3003 = vmatprep.subr.mxu0 0.0
      %3004 = vmatpush1.msra.mxu0 0.0
      %3005 = vmatprep.subr.mxu0 0.0
      %3006 = vmatpush1.msra.mxu0 0.0
      %3007 = vmatprep.subr.mxu0 0.0
      %3008 = vmatpush1.msra.mxu0 0.0
      %3009 = vmatprep.subr.mxu0 0.0
      %3010 = vmatpush1.msra.mxu0 0.0
      %3011 = vmatprep.subr.mxu0 0.0
      %3012 = vmatpush1.msra.mxu0 0.0
      %3013 = vmatprep.subr.mxu0 0.0
      %3014 = vmatpush1.msra.mxu0 0.0
      %3015 = vmatprep.subr.mxu0 0.0
      %3016 = vmatpush1.msra.mxu0 0.0
      %3017 = vmatprep.subr.mxu0 0.0
      %3018 = vmatpush1.msra.mxu0 0.0
      %3019 = vmatprep.subr.mxu0 0.0
      %3020 = vmatpush1.msra.mxu0 0.0
      %3021 = vmatprep.subr.mxu0 0.0
      %3022 = vmatpush1.msra.mxu0 0.0
      %3023 = vmatprep.subr.mxu0 0.0
      %3024 = vmatpush1.msra.mxu0 0.0
      %3025 = vmatprep.subr.mxu0 0.0
      %3026 = vmatpush1.msra.mxu0 0.0
      %3027 = vmatprep.subr.mxu0 0.0
      %3028 = vmatpush1.msra.mxu0 0.0
      %3029 = vmatprep.mubr.f32.mxu0 0.0
      %3030 = vmatmul.mubr.f32.gmra.mrb[0].mxu0 %v2960
      %v3031 = vpop.f32.mrb[0].mxu0
      %v3032 = vadd.f32 0.0, %v3031
      %v3033 = vpop.f32.mrb[0].mxu0
      %3034 = vmatprep.mubr.f32.mxu0 0.0
      %3035 = vmatmul.mubr.f32.gmra.mrb[0].mxu0 %v2963
      %v3036 = vpop.f32.mrb[0].mxu0
      %v3037 = vadd.f32 0.0, %v3036
      %v3038 = vpop.f32.mrb[0].mxu0
      %3039 = vdwg.mxu0
      %v3040 = vadd.f32 %v279, %v3032
      %v3041 = vadd.f32 %v280, %v3037
      %v3043 = vlaneseq
      %v3044 = vshrl.u32 %v3043, 7
      %v3045 = vsub.s32 0, %v3044
      %v3046 = vrot.slane %v266, %v3045
      %v3048 = vadd.f32 %v3040, %v3046
      %v3049 = vadd.f32 %v3041, %v3046
      %v3050 = vsel %vm435, %v3048, 0.0
      %3051 = vadd.xlane.f32.xlu0 %v3050
      %v3052 = vpop.xlane.xlu0 %3051
      %v3053 = vsel %vm435, %v3049, 0.0
      %3054 = vadd.xlane.f32.xlu0 %v3053
      %v3055 = vpop.xlane.xlu0 %3054
      %v3056 = vrcp.pop 8.0
      %v3057 = vmul.f32 %v3052, %v3056
      %v3058 = vmul.f32 %v3055, %v3056
      %v3059 = vsub.f32 %v3048, %v3057
      %v3060 = vsub.f32 %v3049, %v3058
      %v3061 = vmul.f32 %v3059, %v3059
      %v3062 = vmul.f32 %v3060, %v3060
      %v3063 = vsel %vm435, %v3061, 0.0
      %3064 = vadd.xlane.f32.xlu0 %v3063
      %v3065 = vpop.xlane.xlu0 %3064
      %v3066 = vsel %vm435, %v3062, 0.0
      %3067 = vadd.xlane.f32.xlu0 %v3066
      %v3068 = vpop.xlane.xlu0 %3067
      %v3069 = vmul.f32 %v3065, %v3056
      %v3070 = vmul.f32 %v3068, %v3056
      %v3071 = vadd.f32 %v3069, 1e-05
      %v3072 = vadd.f32 %v3070, 1e-05
      %v3073 = vrsqrt.pop %v3071
      %v3074 = vmul.f32 %v3071, %v3073
      %vm3075 = vcmp.eq.f32.partialorder %v3071, inf
      %v3076 = vsel %vm3075, %v3071, %v3074
      %vm3077 = vcmp.eq.f32.partialorder %v3071, 0.0
      %v3078 = vand.u32 %v3071, 2147483648
      %v3079 = vsel %vm3077, %v3078, %v3076
      %v3080 = vrsqrt.pop %v3072
      %v3081 = vmul.f32 %v3072, %v3080
      %vm3082 = vcmp.eq.f32.partialorder %v3072, inf
      %v3083 = vsel %vm3082, %v3072, %v3081
      %vm3084 = vcmp.eq.f32.partialorder %v3072, 0.0
      %v3085 = vand.u32 %v3072, 2147483648
      %v3086 = vsel %vm3084, %v3085, %v3083
      %v3087 = vrsqrt.pop %v3079
      %v3088 = vmul.f32 %v3079, %v3087
      %vm3089 = vcmp.eq.f32.partialorder %v3079, inf
      %v3090 = vsel %vm3089, %v3079, %v3088
      %vm3091 = vcmp.eq.f32.partialorder %v3079, 0.0
      %v3092 = vand.u32 %v3079, 2147483648
      %v3093 = vsel %vm3091, %v3092, %v3090
      %v3094 = vrsqrt.pop %v3086
      %v3095 = vmul.f32 %v3086, %v3094
      %vm3096 = vcmp.eq.f32.partialorder %v3086, inf
      %v3097 = vsel %vm3096, %v3086, %v3095
      %vm3098 = vcmp.eq.f32.partialorder %v3086, 0.0
      %v3099 = vand.u32 %v3086, 2147483648
      %v3100 = vsel %vm3098, %v3099, %v3097
      %v3101 = vrcp.pop %v3093
      %v3102 = vmul.f32 %v3048, %v3101
      %v3103 = vrcp.pop %v3100
      %v3104 = vmul.f32 %v3049, %v3103
    $region74: #{tpu_custom_call.1} parent=1 // loop_footer
      %s276 = sadd.s32 1, %s272
    $region75: #{tpu_custom_call.1} parent=1 // loop_footer_branch
      %271 = sbr.rel target = $region71
    $region76: #{tpu_custom_call.1} parent=1 // loop_exit
      _
    %3107 = vrot.lane.b32.xlu0 %v279, 3
    %v3108 = vpop.permute.xlu0 %3107
    %3109 = vrot.lane.b32.xlu0 %v280, 3
    %v3110 = vpop.permute.xlu0 %3109
    %vm3113 = vcmask 23552
    %v3114 = vsel %vm3113, %v277, %v3108
    %v3115 = vsel %vm3113, %v278, %v3110
    %vm3116 = vcmask 89088
    %v3117 = vsel %vm3116, %v3114, 0.0
    %v3118 = vsel %vm3116, %v3115, 0.0
    %3119 = vst [vmem:[#allocation2] sm:$0xff] %v3117
    %3120 = vst [vmem:[#allocation2 + $0x8] sm:$0xff] %v3118
    // Predicated region
    $region77: #{tpu_custom_call.1} parent=1 // pred_check
      _
    $region78: #{tpu_custom_call.1} parent=1 // pred_check_branch
      %3122 = sbr.rel (0) target = $region80
    $region79: #{tpu_custom_call.1} parent=1 // pred_region
      %s3124 = ssub.s32 256, 256
      %3125 = vsyncadd [#allocation3], %s3124
      %s3126 = sshll.u32 [#allocation2], 4
      %s3127 = int_to_ptr.vmem [resolvable:$true] %s3126
      %3132 = dma.vmem_to_hbm [thread:$0]  %s3127, 256, %s17, [#allocation3], 128, 128, 8
    $region80: #{tpu_custom_call.1} parent=1 // pred_fallthru
      _
    // Predicated region
    $region81: #{tpu_custom_call.1} parent=1 // pred_check
      _
    $region82: #{tpu_custom_call.1} parent=1 // pred_check_branch
      %3134 = sbr.rel (0) target = $region84
    $region83: #{tpu_custom_call.1} parent=1 // pred_region
      %3135 = dma.done [#allocation3], 256
    $region84: #{tpu_custom_call.1} parent=1 // pred_fallthru
      _
    %3136 = vsyncpa [#allocation3], 1

</llo_original>
